<compile_context>
chip_gen: v6e
topology: v6e:2x2x1
jax: 0.10.0
libtpu: 0.0.40
codegen_flags: <defaults>
</compile_context>

<pallas_src>
import functools
import numpy as np

import jax
import jax.numpy as jnp
from jax.experimental import pallas as pl
from jax.experimental.pallas import tpu as pltpu


def _round_up(x, m):
    return ((x + m - 1) // m) * m


# ----------------------------------------------------------------------------
# 'pe' variant: out = concat(sin(coords[..., None, :] * scales), cos(...))
# Fused: replicate per degree + scale (f32) + sin + cos + concat, all in-kernel.
# ----------------------------------------------------------------------------
def _pe_kernel(x_ref, o_ref, *, scales, dim, num_deg):
    # x_ref: [tile_n, dim]   o_ref: [tile_n, 2*num_deg*dim]
    x = x_ref[...].astype(jnp.float32)
    pe_flat = num_deg * dim
    for d in range(num_deg):                      # num_deg is small & static
        lifted = x * scales[d]                    # f32 VPU multiply (scale is a constant)
        o_ref[:, d * dim:(d + 1) * dim] = jnp.sin(lifted).astype(o_ref.dtype)
        o_ref[:, pe_flat + d * dim:pe_flat + (d + 1) * dim] = (
            jnp.cos(lifted).astype(o_ref.dtype)
        )


def pe_forward(coords, min_deg, max_deg, *, tile_cap=1024):
    lead = coords.shape[:-1]
    dim = coords.shape[-1]
    num_deg = int(max_deg - min_deg)
    pe_flat = num_deg * dim
    feat_out = 2 * pe_flat
    N = int(np.prod(lead)) if lead else 1

    # scales baked as compile-time constants (module matches torch: arange(min,max) * 2*pi)
    scales = tuple(float(2.0 * np.pi * d) for d in range(min_deg, max_deg))

    x = coords.reshape(N, dim)
    tile_n = min(tile_cap, _round_up(N, 8))
    N_pad = _round_up(N, tile_n)
    if N_pad != N:
        x = jnp.pad(x, ((0, N_pad - N), (0, 0)))

    kernel = functools.partial(_pe_kernel, scales=scales, dim=dim, num_deg=num_deg)
    out = pl.pallas_call(
        kernel,
        out_shape=jax.ShapeDtypeStruct((N_pad, feat_out), coords.dtype),
        grid_spec=pltpu.PrefetchScalarGridSpec(
            num_scalar_prefetch=0,
            grid=(N_pad // tile_n,),
            in_specs=[pl.BlockSpec((tile_n, dim), lambda i: (i, 0))],
            out_specs=pl.BlockSpec((tile_n, feat_out), lambda i: (i, 0)),
        ),
        compiler_params=pltpu.CompilerParams(dimension_semantics=("parallel",)),
    )(x)
    if N_pad != N:
        out = out[:N]
    return out.reshape(*lead, feat_out)


# ----------------------------------------------------------------------------
# 'pe_rand' variant: out = cos( sum_i coords[..., i:i+1] @ W_i^T  (+ bias_sum) )
#                        = cos( coords @ W + bias_sum )
# dim is tiny (<=8), so the contraction is done with VPU broadcast FMAs (no MXU).
# ----------------------------------------------------------------------------
def _pe_rand_kernel(x_ref, w_ref, b_ref, o_ref, *, dim):
    # x_ref: [tile_n, dim], w_ref: [dim, pe_dim], b_ref: [1, pe_dim]
    x = x_ref[...].astype(jnp.float32)
    w = w_ref[...].astype(jnp.float32)
    z = x[:, 0:1] * w[0:1, :]
    for i in range(1, dim):                       # dim small & static
        z = z + x[:, i:i + 1] * w[i:i + 1, :]
    z = z + b_ref[...].astype(jnp.float32)
    o_ref[...] = jnp.cos(z).astype(o_ref.dtype)


def pe_rand_forward(coords, W, bias_sum, *, tile_cap=1024):
    lead = coords.shape[:-1]
    dim = coords.shape[-1]
    pe_dim = W.shape[1]
    N = int(np.prod(lead)) if lead else 1

    x = coords.reshape(N, dim)
    tile_n = min(tile_cap, _round_up(N, 8))
    N_pad = _round_up(N, tile_n)
    if N_pad != N:
        x = jnp.pad(x, ((0, N_pad - N), (0, 0)))

    b2 = bias_sum.reshape(1, pe_dim)

    kernel = functools.partial(_pe_rand_kernel, dim=dim)
    out = pl.pallas_call(
        kernel,
        out_shape=jax.ShapeDtypeStruct((N_pad, pe_dim), coords.dtype),
        grid_spec=pltpu.PrefetchScalarGridSpec(
            num_scalar_prefetch=0,
            grid=(N_pad // tile_n,),
            in_specs=[
                pl.BlockSpec((tile_n, dim), lambda i: (i, 0)),
                pl.BlockSpec((dim, pe_dim), lambda i: (0, 0)),  # full-extent (resident)
                pl.BlockSpec((1, pe_dim), lambda i: (0, 0)),    # full-extent (resident)
            ],
            out_specs=pl.BlockSpec((tile_n, pe_dim), lambda i: (i, 0)),
        ),
        compiler_params=pltpu.CompilerParams(dimension_semantics=("parallel",)),
    )(x, W, b2)
    if N_pad != N:
        out = out[:N]
    return out.reshape(*lead, pe_dim)


# ----------------------------------------------------------------------------
# PE_All wrapper mirroring the PyTorch module's dispatch.
# ----------------------------------------------------------------------------
class PEAll:
    def __init__(self, pe_cho, pe_args):
        self.pe_cho = pe_cho
        if pe_cho == "pe":
            min_deg, max_deg, dtype, verbose = pe_args
            self.min_deg = int(min_deg)
            self.max_deg = int(max_deg)
            self.dtype = dtype
        elif pe_cho == "pe_rand":
            dim, pe_dim, pe_omega, pe_bias, dtype, verbose, seed = pe_args
            # mapping i: weight_i = 2*pi*omega * randn(pe_dim), seeded with (seed + i)
            cols = []
            biases = []
            for i in range(dim):
                k = jax.random.PRNGKey(seed + i)
                w = 2.0 * jnp.pi * pe_omega * jax.random.normal(k, (pe_dim,), dtype=dtype)
                cols.append(w)
                if pe_bias:
                    # nn.Linear(1, pe_dim) bias init: U(-1, 1); deterministic synthetic init
                    kb = jax.random.PRNGKey(10_000 + seed + i)
                    biases.append(
                        jax.random.uniform(kb, (pe_dim,), dtype=dtype, minval=-1.0, maxval=1.0)
                    )
            self.W = jnp.stack(cols, axis=0)  # [dim, pe_dim]; W[i,:] = weight of mapping i
            if pe_bias:
                self.bias_sum = jnp.sum(jnp.stack(biases, axis=0), axis=0)
            else:
                self.bias_sum = jnp.zeros((pe_dim,), dtype=dtype)
        else:
            # TODO(synk): 'pe_mix_dim', 'rand_gaus', 'rand_gaus_linr' class defs were not provided.
            raise Exception("Unsupported positional encoding pe choice")

    def __call__(self, input):
        coords, _covar = input
        if self.pe_cho == "pe":
            return pe_forward(coords, self.min_deg, self.max_deg)
        else:
            return pe_rand_forward(coords, self.W, self.bias_sum)


if __name__ == "__main__":
    key = jax.random.PRNGKey(0)
    bsz, nsmpl, dim = 2, 8, 3
    coords = jax.random.uniform(key, (bsz, nsmpl, dim), dtype=jnp.float32)

    # ---- 'pe' path ----
    min_deg, max_deg = 0, 4
    pe = PEAll("pe", (min_deg, max_deg, jnp.float32, False))
    out_pe = pe((coords, None))
    jax.block_until_ready(out_pe)
    # reference (plain JAX, mirrors torch semantics)
    scales = (jnp.arange(min_deg, max_deg, dtype=jnp.float32) * 2 * jnp.pi)[:, None]
    lifted = (coords[..., None, :] * scales).reshape(bsz, nsmpl, -1)
    ref_pe = jnp.concatenate([jnp.sin(lifted), jnp.cos(lifted)], axis=-1)
    np.testing.assert_allclose(np.asarray(out_pe), np.asarray(ref_pe), rtol=1e-3, atol=1e-3)
    assert out_pe.shape == (bsz, nsmpl, 2 * (max_deg - min_deg) * dim)

    # ---- 'pe_rand' path (no bias) ----
    pe_dim, omega, seed = 32, 1.0, 0
    pe_rand = PEAll("pe_rand", (dim, pe_dim, omega, False, jnp.float32, False, seed))
    out_rand = pe_rand((coords, None))
    jax.block_until_ready(out_rand)
    ref_rand = jnp.cos(coords @ pe_rand.W + pe_rand.bias_sum)
    np.testing.assert_allclose(np.asarray(out_rand), np.asarray(ref_rand), rtol=1e-3, atol=1e-3)
    assert out_rand.shape == (bsz, nsmpl, pe_dim)

    # ---- 'pe_rand' path (with bias) ----
    pe_rand_b = PEAll("pe_rand", (dim, pe_dim, omega, True, jnp.float32, False, seed))
    out_rand_b = pe_rand_b((coords, None))
    jax.block_until_ready(out_rand_b)
    ref_rand_b = jnp.cos(coords @ pe_rand_b.W + pe_rand_b.bias_sum)
    np.testing.assert_allclose(np.asarray(out_rand_b), np.asarray(ref_rand_b),
                               rtol=1e-3, atol=1e-3)

    print("KERNEL_OK")
</pallas_src>

<mosaic_0001>
module attributes {stable_mosaic.version = 11 : i64} {
  func.func @_pe_kernel(%arg0: i32, %arg1: memref<16x3xf32, #tpu.memory_space<vmem>>, %arg2: memref<16x24xf32, #tpu.memory_space<vmem>>) attributes {dimension_semantics = [#tpu.dimension_semantics<parallel>], iteration_bounds = array<i64: 1>, scalar_prefetch = 0 : i64, scratch_operands = 0 : i64, tpu.core_type = #tpu.core_type<tc>, window_params = [{transform_indices = @transform_0, window_bounds = array<i64: 16, 3>}, {transform_indices = @transform_1, window_bounds = array<i64: 16, 24>}]} {
    %c0 = arith.constant 0 : index
    %c0_0 = arith.constant 0 : index
    %0 = vector.load %arg1[%c0, %c0_0] : memref<16x3xf32, #tpu.memory_space<vmem>>, vector<16x3xf32>
    %cst = arith.constant 0.000000e+00 : f32
    %1 = vector.broadcast %cst : f32 to vector<16x3xf32>
    %2 = arith.mulf %0, %1 : vector<16x3xf32>
    %3 = math.sin %2 : vector<16x3xf32>
    %c0_1 = arith.constant 0 : index
    %c0_2 = arith.constant 0 : index
    %4 = vector.load %arg2[%c0_1, %c0_2] : memref<16x24xf32, #tpu.memory_space<vmem>>, vector<16x3xf32>
    tpu.vector_store %arg2[%c0_1, %c0_2], %3 {strides = array<i32>} : memref<16x24xf32, #tpu.memory_space<vmem>>, vector<16x3xf32>,
    %5 = math.cos %2 : vector<16x3xf32>
    %c0_3 = arith.constant 0 : index
    %c12 = arith.constant 12 : index
    %6 = vector.load %arg2[%c0_3, %c12] : memref<16x24xf32, #tpu.memory_space<vmem>>, vector<16x3xf32>
    tpu.vector_store %arg2[%c0_3, %c12], %5 {strides = array<i32>} : memref<16x24xf32, #tpu.memory_space<vmem>>, vector<16x3xf32>,
    %cst_4 = arith.constant 6.28318548 : f32
    %7 = vector.broadcast %cst_4 : f32 to vector<16x3xf32>
    %8 = arith.mulf %0, %7 : vector<16x3xf32>
    %9 = math.sin %8 : vector<16x3xf32>
    %c0_5 = arith.constant 0 : index
    %c3 = arith.constant 3 : index
    %10 = vector.load %arg2[%c0_5, %c3] : memref<16x24xf32, #tpu.memory_space<vmem>>, vector<16x3xf32>
    tpu.vector_store %arg2[%c0_5, %c3], %9 {strides = array<i32>} : memref<16x24xf32, #tpu.memory_space<vmem>>, vector<16x3xf32>,
    %11 = math.cos %8 : vector<16x3xf32>
    %c0_6 = arith.constant 0 : index
    %c15 = arith.constant 15 : index
    %12 = vector.load %arg2[%c0_6, %c15] : memref<16x24xf32, #tpu.memory_space<vmem>>, vector<16x3xf32>
    tpu.vector_store %arg2[%c0_6, %c15], %11 {strides = array<i32>} : memref<16x24xf32, #tpu.memory_space<vmem>>, vector<16x3xf32>,
    %cst_7 = arith.constant 12.566371 : f32
    %13 = vector.broadcast %cst_7 : f32 to vector<16x3xf32>
    %14 = arith.mulf %0, %13 : vector<16x3xf32>
    %15 = math.sin %14 : vector<16x3xf32>
    %c0_8 = arith.constant 0 : index
    %c6 = arith.constant 6 : index
    %16 = vector.load %arg2[%c0_8, %c6] : memref<16x24xf32, #tpu.memory_space<vmem>>, vector<16x3xf32>
    tpu.vector_store %arg2[%c0_8, %c6], %15 {strides = array<i32>} : memref<16x24xf32, #tpu.memory_space<vmem>>, vector<16x3xf32>,
    %17 = math.cos %14 : vector<16x3xf32>
    %c0_9 = arith.constant 0 : index
    %c18 = arith.constant 18 : index
    %18 = vector.load %arg2[%c0_9, %c18] : memref<16x24xf32, #tpu.memory_space<vmem>>, vector<16x3xf32>
    tpu.vector_store %arg2[%c0_9, %c18], %17 {strides = array<i32>} : memref<16x24xf32, #tpu.memory_space<vmem>>, vector<16x3xf32>,
    %cst_10 = arith.constant 18.849556 : f32
    %19 = vector.broadcast %cst_10 : f32 to vector<16x3xf32>
    %20 = arith.mulf %0, %19 : vector<16x3xf32>
    %21 = math.sin %20 : vector<16x3xf32>
    %c0_11 = arith.constant 0 : index
    %c9 = arith.constant 9 : index
    %22 = vector.load %arg2[%c0_11, %c9] : memref<16x24xf32, #tpu.memory_space<vmem>>, vector<16x3xf32>
    tpu.vector_store %arg2[%c0_11, %c9], %21 {strides = array<i32>} : memref<16x24xf32, #tpu.memory_space<vmem>>, vector<16x3xf32>,
    %23 = math.cos %20 : vector<16x3xf32>
    %c0_12 = arith.constant 0 : index
    %c21 = arith.constant 21 : index
    %24 = vector.load %arg2[%c0_12, %c21] : memref<16x24xf32, #tpu.memory_space<vmem>>, vector<16x3xf32>
    tpu.vector_store %arg2[%c0_12, %c21], %23 {strides = array<i32>} : memref<16x24xf32, #tpu.memory_space<vmem>>, vector<16x3xf32>,
    return
  }
  func.func @transform_0(%arg0: i32) -> (i32, i32) {
    %c0_i32 = arith.constant 0 : i32
    %c0_i32_0 = arith.constant 0 : i32
    return %arg0, %c0_i32 : i32, i32
  }
  func.func @transform_1(%arg0: i32) -> (i32, i32) {
    %c0_i32 = arith.constant 0 : i32
    %c0_i32_0 = arith.constant 0 : i32
    return %arg0, %c0_i32 : i32, i32
  }
}

</mosaic_0001>

<llo_original>
// kernel: tpu_custom_call.1
$region0: #{tpu_custom_call.1}
  #allocation0 [shape = 'u32[]', space=smem, size = 0x4, offset = 0x4, fixed_abs, tag = 'smem constant byte address 0x4 - core index']
  #allocation1 [shape = 'u32[144,128]{1,0:T(1,128)}', space=vmem, size = 0x12000, scoped, tag = 'internal scratch']
  %s0 = inlined_call_operand.vmem [shape: f32[16,3], index: 0, kind: input, shape index: {}]
  %s1 = inlined_call_operand.hbm [shape: f32[16,24], index: 1, kind: output, shape index: {}]
  %s2 = sld [smem:[#allocation0]]
  $region14: #{tpu_custom_call.1} parent=0
    _
  %s4 = ssub.s32 1, %s2
  %s5 = scalar_select 0, %s4, %s2
  $region1: #{tpu_custom_call.1} parent=0
    #allocation2 [shape = 'u8[8192]{0}', space=vmem, size = 0x2000, scoped, tag = 'output window, operand 0, single buffered']
    #allocation3 [shape = 's32[1]{0}', space=sflag, size = 0x4, scoped, tag = 'scoped memory for tpu_custom_call.1']
    %6 = vsyncpa [#allocation3], 0
    // Predicated region
    $region2: #{tpu_custom_call.1} parent=1 // pred_check
      _
    $region3: #{tpu_custom_call.1} parent=1 // pred_check_branch
      %8 = sbr.rel (0) target = $region5
    $region4: #{tpu_custom_call.1} parent=1 // pred_region
      _
    $region5: #{tpu_custom_call.1} parent=1 // pred_fallthru
      _
    %v9 = vld [vmem:[%s0] sm:$0xff]
    %v10 = vld [vmem:[%s0 + $0x8] sm:$0xff]
    %v11 = vmul.f32 %v9, 0.0
    %v12 = vmul.f32 %v10, 0.0
    %v13 = vand.u32 2147483647, %v11
    %vm14 = vcmp.le.f32.partialorder %v13, 0.7853982
    %vm15 = vcmp.lt.s32.totalorder %v11, 0
    %v16 = vand.u32 %v11, 2139095040
    %v17 = vshrl.u32 %v16, 23
    %v18 = vsub.s32 %v17, 127
    %v19 = vand.u32 2147483647, %v11
    %v20 = vand.u32 %v19, 8388607
    %v21 = vor.u32 %v20, 8388608
    %v22 = vsub.s32 0, %v21
    %v23 = vadd.s32 %v18, 1
    %vm24 = vcmp.gt.s32.totalorder %v23, 0
    %v25 = vsel %vm24, %v23, 0
    %v26 = vshrl.u32 %v25, 5
    %v27 = vand.u32 %v25, 31
    %v28 = vsub.s32 32, %v27
    %v29 = vshrl.u32 683565275, %v28
    %v30 = vshll.u32 683565275, %v27
    %v31 = vshrl.u32 2475754826, %v28
    %v32 = vor.u32 %v30, %v31
    %v33 = vshll.u32 2475754826, %v27
    %v34 = vshrl.u32 2131351028, %v28
    %v35 = vor.u32 %v33, %v34
    %v36 = vshll.u32 2131351028, %v27
    %v37 = vshrl.u32 2102212464, %v28
    %v38 = vor.u32 %v36, %v37
    %v39 = vshll.u32 2102212464, %v27
    %v40 = vshrl.u32 920167782, %v28
    %v41 = vor.u32 %v39, %v40
    %v42 = vshll.u32 920167782, %v27
    %v43 = vshrl.u32 1326507024, %v28
    %v44 = vor.u32 %v42, %v43
    %vm45 = vcmp.lt.s32.totalorder %v26, 1
    %vm46 = vcmp.lt.s32.totalorder %v26, 2
    %vm47 = vcmp.lt.s32.totalorder %v26, 3
    %vm48 = vcmp.lt.s32.totalorder %v26, 4
    %v49 = vsel %vm45, %v29, %v32
    %v50 = vsel %vm48, %v38, 2102212464
    %v51 = vsel %vm47, %v35, %v50
    %v52 = vsel %vm46, %v49, %v51
    %v53 = vsel %vm45, %v32, %v35
    %v54 = vsel %vm48, %v41, 920167782
    %v55 = vsel %vm47, %v38, %v54
    %v56 = vsel %vm46, %v53, %v55
    %v57 = vsel %vm45, %v35, %v38
    %v58 = vsel %vm48, %v44, 1326507024
    %v59 = vsel %vm47, %v41, %v58
    %v60 = vsel %vm46, %v57, %v59
    %v61 = vshll.u32 %v21, 8
    %v62 = vmul.u32.u64.compose %v61, %v60
    %v63 = vextract.low.u32 %v62
    %v64 = vextract.high.u32 %v62
    %v65 = vmul.u32.u64.compose %v61, %v56
    %v66 = vextract.low.u32 %v65
    %v67 = vextract.high.u32 %v65
    %v68 = vmul.u32 %v61, %v52
    %v69 = vadd.s32 %v64, %v66
    %vm70 = vc.u32 %v64, %v66
    %v71 = vadd.s32 %v67, 1
    %v72 = vsel %vm70, %v71, %v67
    %v73 = vadd.s32 %v68, %v72
    %v74 = vadd.s32 %v73, 536870912
    %v75 = vshrl.u32 %v74, 30
    %v76 = vshll.u32 %v75, 30
    %v77 = vsub.s32 %v73, %v76
    %vm78 = vcmp.lt.s32.totalorder %v77, 0
    %v79 = vsub.s32 0, %v77
    %v80 = vsel %vm78, %v79, %v77
    %v81 = vclz %v80
    %v82 = vsub.s32 %v81, 2
    %vm83 = vcmp.gt.s32.totalorder 0, %v82
    %v84 = vsel %vm83, 0, %v82
    %v85 = vsub.s32 32, %v84
    %v86 = vshll.u32 %v77, %v84
    %v87 = vshrl.u32 %v69, %v85
    %v88 = vor.u32 %v86, %v87
    %v89 = vsub.s32 4294967266, %v84
    %v90 = vadd.s32 %v89, 127
    %v91 = vshll.u32 %v90, 23
    %v92 = vor.u32 4788187, %v91
    %v93 = vand.u32 2147483647, %v92
    %v95 = vcvt.s32.f32 %v88
    %v96 = vmul.f32 %v95, %v93
    %v97 = vxor.u32 %v96, 2147483648
    %v98 = vsel %vm15, %v97, %v96
    %v99 = vsub.s32 4, %v75
    %v100 = vsel %vm15, %v99, %v75
    %v101 = vsel %vm14, %v11, %v98
    %v102 = vsel %vm14, 0, %v100
    %v103 = vcosq.f32.pop %v101
    %v104 = vsinq.f32.pop %v101
    %vm105 = vweird.f32 %v11
    %v106 = vadd.s32 %v102, 3
    %v107 = vand.u32 %v106, 3
    %vm108 = vcmp.lt.s32.totalorder %v107, 2
    %vm109 = vcmp.eq.s32.totalorder %v107, 0
    %v110 = vxor.u32 %v104, 2147483648
    %v111 = vsel %vm109, %v103, %v110
    %vm112 = vcmp.eq.s32.totalorder %v107, 2
    %v113 = vxor.u32 %v103, 2147483648
    %v114 = vsel %vm112, %v113, %v104
    %v115 = vsel %vm108, %v111, %v114
    %v116 = vsel %vm105, nan, %v115
    %v117 = vand.u32 2147483647, %v12
    %vm118 = vcmp.le.f32.partialorder %v117, 0.7853982
    %vm119 = vcmp.lt.s32.totalorder %v12, 0
    %v120 = vand.u32 %v12, 2139095040
    %v121 = vshrl.u32 %v120, 23
    %v122 = vsub.s32 %v121, 127
    %v123 = vand.u32 2147483647, %v12
    %v124 = vand.u32 %v123, 8388607
    %v125 = vor.u32 %v124, 8388608
    %v126 = vsub.s32 0, %v125
    %v127 = vadd.s32 %v122, 1
    %vm128 = vcmp.gt.s32.totalorder %v127, 0
    %v129 = vsel %vm128, %v127, 0
    %v130 = vshrl.u32 %v129, 5
    %v131 = vand.u32 %v129, 31
    %v132 = vsub.s32 32, %v131
    %v133 = vshrl.u32 683565275, %v132
    %v134 = vshll.u32 683565275, %v131
    %v135 = vshrl.u32 2475754826, %v132
    %v136 = vor.u32 %v134, %v135
    %v137 = vshll.u32 2475754826, %v131
    %v138 = vshrl.u32 2131351028, %v132
    %v139 = vor.u32 %v137, %v138
    %v140 = vshll.u32 2131351028, %v131
    %v141 = vshrl.u32 2102212464, %v132
    %v142 = vor.u32 %v140, %v141
    %v143 = vshll.u32 2102212464, %v131
    %v144 = vshrl.u32 920167782, %v132
    %v145 = vor.u32 %v143, %v144
    %v146 = vshll.u32 920167782, %v131
    %v147 = vshrl.u32 1326507024, %v132
    %v148 = vor.u32 %v146, %v147
    %vm149 = vcmp.lt.s32.totalorder %v130, 1
    %vm150 = vcmp.lt.s32.totalorder %v130, 2
    %vm151 = vcmp.lt.s32.totalorder %v130, 3
    %vm152 = vcmp.lt.s32.totalorder %v130, 4
    %v153 = vsel %vm149, %v133, %v136
    %v154 = vsel %vm152, %v142, 2102212464
    %v155 = vsel %vm151, %v139, %v154
    %v156 = vsel %vm150, %v153, %v155
    %v157 = vsel %vm149, %v136, %v139
    %v158 = vsel %vm152, %v145, 920167782
    %v159 = vsel %vm151, %v142, %v158
    %v160 = vsel %vm150, %v157, %v159
    %v161 = vsel %vm149, %v139, %v142
    %v162 = vsel %vm152, %v148, 1326507024
    %v163 = vsel %vm151, %v145, %v162
    %v164 = vsel %vm150, %v161, %v163
    %v165 = vshll.u32 %v125, 8
    %v166 = vmul.u32.u64.compose %v165, %v164
    %v167 = vextract.low.u32 %v166
    %v168 = vextract.high.u32 %v166
    %v169 = vmul.u32.u64.compose %v165, %v160
    %v170 = vextract.low.u32 %v169
    %v171 = vextract.high.u32 %v169
    %v172 = vmul.u32 %v165, %v156
    %v173 = vadd.s32 %v168, %v170
    %vm174 = vc.u32 %v168, %v170
    %v175 = vadd.s32 %v171, 1
    %v176 = vsel %vm174, %v175, %v171
    %v177 = vadd.s32 %v172, %v176
    %v178 = vadd.s32 %v177, 536870912
    %v179 = vshrl.u32 %v178, 30
    %v180 = vshll.u32 %v179, 30
    %v181 = vsub.s32 %v177, %v180
    %vm182 = vcmp.lt.s32.totalorder %v181, 0
    %v183 = vsub.s32 0, %v181
    %v184 = vsel %vm182, %v183, %v181
    %v185 = vclz %v184
    %v186 = vsub.s32 %v185, 2
    %vm187 = vcmp.gt.s32.totalorder 0, %v186
    %v188 = vsel %vm187, 0, %v186
    %v189 = vsub.s32 32, %v188
    %v190 = vshll.u32 %v181, %v188
    %v191 = vshrl.u32 %v173, %v189
    %v192 = vor.u32 %v190, %v191
    %v193 = vsub.s32 4294967266, %v188
    %v194 = vadd.s32 %v193, 127
    %v195 = vshll.u32 %v194, 23
    %v196 = vor.u32 4788187, %v195
    %v197 = vand.u32 2147483647, %v196
    %v199 = vcvt.s32.f32 %v192
    %v200 = vmul.f32 %v199, %v197
    %v201 = vxor.u32 %v200, 2147483648
    %v202 = vsel %vm119, %v201, %v200
    %v203 = vsub.s32 4, %v179
    %v204 = vsel %vm119, %v203, %v179
    %v205 = vsel %vm118, %v12, %v202
    %v206 = vsel %vm118, 0, %v204
    %v207 = vcosq.f32.pop %v205
    %v208 = vsinq.f32.pop %v205
    %vm209 = vweird.f32 %v12
    %v210 = vadd.s32 %v206, 3
    %v211 = vand.u32 %v210, 3
    %vm212 = vcmp.lt.s32.totalorder %v211, 2
    %vm213 = vcmp.eq.s32.totalorder %v211, 0
    %v214 = vxor.u32 %v208, 2147483648
    %v215 = vsel %vm213, %v207, %v214
    %vm216 = vcmp.eq.s32.totalorder %v211, 2
    %v217 = vxor.u32 %v207, 2147483648
    %v218 = vsel %vm216, %v217, %v208
    %v219 = vsel %vm212, %v215, %v218
    %v220 = vsel %vm209, nan, %v219
    %vm221 = vcmask 23552
    %222 = vst.msk [vmem:[#allocation2] sm:$0xff] %vm221, %v116
    %223 = vst.msk [vmem:[#allocation2 + $0x8] sm:$0xff] %vm221, %v220
    %v224 = vand.u32 2147483647, %v11
    %vm225 = vcmp.le.f32.partialorder %v224, 0.7853982
    %vm226 = vcmp.lt.s32.totalorder %v11, 0
    %v227 = vand.u32 %v11, 2139095040
    %v228 = vshrl.u32 %v227, 23
    %v229 = vsub.s32 %v228, 127
    %v230 = vand.u32 2147483647, %v11
    %v231 = vand.u32 %v230, 8388607
    %v232 = vor.u32 %v231, 8388608
    %v233 = vsub.s32 0, %v232
    %v234 = vadd.s32 %v229, 1
    %vm235 = vcmp.gt.s32.totalorder %v234, 0
    %v236 = vsel %vm235, %v234, 0
    %v237 = vshrl.u32 %v236, 5
    %v238 = vand.u32 %v236, 31
    %v239 = vsub.s32 32, %v238
    %v240 = vshrl.u32 683565275, %v239
    %v241 = vshll.u32 683565275, %v238
    %v242 = vshrl.u32 2475754826, %v239
    %v243 = vor.u32 %v241, %v242
    %v244 = vshll.u32 2475754826, %v238
    %v245 = vshrl.u32 2131351028, %v239
    %v246 = vor.u32 %v244, %v245
    %v247 = vshll.u32 2131351028, %v238
    %v248 = vshrl.u32 2102212464, %v239
    %v249 = vor.u32 %v247, %v248
    %v250 = vshll.u32 2102212464, %v238
    %v251 = vshrl.u32 920167782, %v239
    %v252 = vor.u32 %v250, %v251
    %v253 = vshll.u32 920167782, %v238
    %v254 = vshrl.u32 1326507024, %v239
    %v255 = vor.u32 %v253, %v254
    %vm256 = vcmp.lt.s32.totalorder %v237, 1
    %vm257 = vcmp.lt.s32.totalorder %v237, 2
    %vm258 = vcmp.lt.s32.totalorder %v237, 3
    %vm259 = vcmp.lt.s32.totalorder %v237, 4
    %v260 = vsel %vm256, %v240, %v243
    %v261 = vsel %vm259, %v249, 2102212464
    %v262 = vsel %vm258, %v246, %v261
    %v263 = vsel %vm257, %v260, %v262
    %v264 = vsel %vm256, %v243, %v246
    %v265 = vsel %vm259, %v252, 920167782
    %v266 = vsel %vm258, %v249, %v265
    %v267 = vsel %vm257, %v264, %v266
    %v268 = vsel %vm256, %v246, %v249
    %v269 = vsel %vm259, %v255, 1326507024
    %v270 = vsel %vm258, %v252, %v269
    %v271 = vsel %vm257, %v268, %v270
    %v272 = vshll.u32 %v232, 8
    %v273 = vmul.u32.u64.compose %v272, %v271
    %v274 = vextract.low.u32 %v273
    %v275 = vextract.high.u32 %v273
    %v276 = vmul.u32.u64.compose %v272, %v267
    %v277 = vextract.low.u32 %v276
    %v278 = vextract.high.u32 %v276
    %v279 = vmul.u32 %v272, %v263
    %v280 = vadd.s32 %v275, %v277
    %vm281 = vc.u32 %v275, %v277
    %v282 = vadd.s32 %v278, 1
    %v283 = vsel %vm281, %v282, %v278
    %v284 = vadd.s32 %v279, %v283
    %v285 = vadd.s32 %v284, 536870912
    %v286 = vshrl.u32 %v285, 30
    %v287 = vshll.u32 %v286, 30
    %v288 = vsub.s32 %v284, %v287
    %vm289 = vcmp.lt.s32.totalorder %v288, 0
    %v290 = vsub.s32 0, %v288
    %v291 = vsel %vm289, %v290, %v288
    %v292 = vclz %v291
    %v293 = vsub.s32 %v292, 2
    %vm294 = vcmp.gt.s32.totalorder 0, %v293
    %v295 = vsel %vm294, 0, %v293
    %v296 = vsub.s32 32, %v295
    %v297 = vshll.u32 %v288, %v295
    %v298 = vshrl.u32 %v280, %v296
    %v299 = vor.u32 %v297, %v298
    %v300 = vsub.s32 4294967266, %v295
    %v301 = vadd.s32 %v300, 127
    %v302 = vshll.u32 %v301, 23
    %v303 = vor.u32 4788187, %v302
    %v304 = vand.u32 2147483647, %v303
    %v306 = vcvt.s32.f32 %v299
    %v307 = vmul.f32 %v306, %v304
    %v308 = vxor.u32 %v307, 2147483648
    %v309 = vsel %vm226, %v308, %v307
    %v310 = vsub.s32 4, %v286
    %v311 = vsel %vm226, %v310, %v286
    %v312 = vsel %vm225, %v11, %v309
    %v313 = vsel %vm225, 0, %v311
    %v314 = vcosq.f32.pop %v312
    %v315 = vsinq.f32.pop %v312
    %vm316 = vweird.f32 %v11
    %v317 = vand.u32 %v313, 3
    %vm318 = vcmp.lt.s32.totalorder %v317, 2
    %vm319 = vcmp.eq.s32.totalorder %v317, 0
    %v320 = vxor.u32 %v315, 2147483648
    %v321 = vsel %vm319, %v314, %v320
    %vm322 = vcmp.eq.s32.totalorder %v317, 2
    %v323 = vxor.u32 %v314, 2147483648
    %v324 = vsel %vm322, %v323, %v315
    %v325 = vsel %vm318, %v321, %v324
    %v326 = vsel %vm316, nan, %v325
    %v327 = vand.u32 2147483647, %v12
    %vm328 = vcmp.le.f32.partialorder %v327, 0.7853982
    %vm329 = vcmp.lt.s32.totalorder %v12, 0
    %v330 = vand.u32 %v12, 2139095040
    %v331 = vshrl.u32 %v330, 23
    %v332 = vsub.s32 %v331, 127
    %v333 = vand.u32 2147483647, %v12
    %v334 = vand.u32 %v333, 8388607
    %v335 = vor.u32 %v334, 8388608
    %v336 = vsub.s32 0, %v335
    %v337 = vadd.s32 %v332, 1
    %vm338 = vcmp.gt.s32.totalorder %v337, 0
    %v339 = vsel %vm338, %v337, 0
    %v340 = vshrl.u32 %v339, 5
    %v341 = vand.u32 %v339, 31
    %v342 = vsub.s32 32, %v341
    %v343 = vshrl.u32 683565275, %v342
    %v344 = vshll.u32 683565275, %v341
    %v345 = vshrl.u32 2475754826, %v342
    %v346 = vor.u32 %v344, %v345
    %v347 = vshll.u32 2475754826, %v341
    %v348 = vshrl.u32 2131351028, %v342
    %v349 = vor.u32 %v347, %v348
    %v350 = vshll.u32 2131351028, %v341
    %v351 = vshrl.u32 2102212464, %v342
    %v352 = vor.u32 %v350, %v351
    %v353 = vshll.u32 2102212464, %v341
    %v354 = vshrl.u32 920167782, %v342
    %v355 = vor.u32 %v353, %v354
    %v356 = vshll.u32 920167782, %v341
    %v357 = vshrl.u32 1326507024, %v342
    %v358 = vor.u32 %v356, %v357
    %vm359 = vcmp.lt.s32.totalorder %v340, 1
    %vm360 = vcmp.lt.s32.totalorder %v340, 2
    %vm361 = vcmp.lt.s32.totalorder %v340, 3
    %vm362 = vcmp.lt.s32.totalorder %v340, 4
    %v363 = vsel %vm359, %v343, %v346
    %v364 = vsel %vm362, %v352, 2102212464
    %v365 = vsel %vm361, %v349, %v364
    %v366 = vsel %vm360, %v363, %v365
    %v367 = vsel %vm359, %v346, %v349
    %v368 = vsel %vm362, %v355, 920167782
    %v369 = vsel %vm361, %v352, %v368
    %v370 = vsel %vm360, %v367, %v369
    %v371 = vsel %vm359, %v349, %v352
    %v372 = vsel %vm362, %v358, 1326507024
    %v373 = vsel %vm361, %v355, %v372
    %v374 = vsel %vm360, %v371, %v373
    %v375 = vshll.u32 %v335, 8
    %v376 = vmul.u32.u64.compose %v375, %v374
    %v377 = vextract.low.u32 %v376
    %v378 = vextract.high.u32 %v376
    %v379 = vmul.u32.u64.compose %v375, %v370
    %v380 = vextract.low.u32 %v379
    %v381 = vextract.high.u32 %v379
    %v382 = vmul.u32 %v375, %v366
    %v383 = vadd.s32 %v378, %v380
    %vm384 = vc.u32 %v378, %v380
    %v385 = vadd.s32 %v381, 1
    %v386 = vsel %vm384, %v385, %v381
    %v387 = vadd.s32 %v382, %v386
    %v388 = vadd.s32 %v387, 536870912
    %v389 = vshrl.u32 %v388, 30
    %v390 = vshll.u32 %v389, 30
    %v391 = vsub.s32 %v387, %v390
    %vm392 = vcmp.lt.s32.totalorder %v391, 0
    %v393 = vsub.s32 0, %v391
    %v394 = vsel %vm392, %v393, %v391
    %v395 = vclz %v394
    %v396 = vsub.s32 %v395, 2
    %vm397 = vcmp.gt.s32.totalorder 0, %v396
    %v398 = vsel %vm397, 0, %v396
    %v399 = vsub.s32 32, %v398
    %v400 = vshll.u32 %v391, %v398
    %v401 = vshrl.u32 %v383, %v399
    %v402 = vor.u32 %v400, %v401
    %v403 = vsub.s32 4294967266, %v398
    %v404 = vadd.s32 %v403, 127
    %v405 = vshll.u32 %v404, 23
    %v406 = vor.u32 4788187, %v405
    %v407 = vand.u32 2147483647, %v406
    %v409 = vcvt.s32.f32 %v402
    %v410 = vmul.f32 %v409, %v407
    %v411 = vxor.u32 %v410, 2147483648
    %v412 = vsel %vm329, %v411, %v410
    %v413 = vsub.s32 4, %v389
    %v414 = vsel %vm329, %v413, %v389
    %v415 = vsel %vm328, %v12, %v412
    %v416 = vsel %vm328, 0, %v414
    %v417 = vcosq.f32.pop %v415
    %v418 = vsinq.f32.pop %v415
    %vm419 = vweird.f32 %v12
    %v420 = vand.u32 %v416, 3
    %vm421 = vcmp.lt.s32.totalorder %v420, 2
    %vm422 = vcmp.eq.s32.totalorder %v420, 0
    %v423 = vxor.u32 %v418, 2147483648
    %v424 = vsel %vm422, %v417, %v423
    %vm425 = vcmp.eq.s32.totalorder %v420, 2
    %v426 = vxor.u32 %v417, 2147483648
    %v427 = vsel %vm425, %v426, %v418
    %v428 = vsel %vm421, %v424, %v427
    %v429 = vsel %vm419, nan, %v428
    %432 = vrot.lane.b32.xlu0 %v326, 12
    %v433 = vpop.permute.xlu0 %432
    %434 = vrot.lane.b32.xlu0 %v429, 12
    %v435 = vpop.permute.xlu0 %434
    %vm438 = vcmask 121952
    %439 = vst.msk [vmem:[#allocation2] sm:$0xff] %vm438, %v433
    %440 = vst.msk [vmem:[#allocation2 + $0x8] sm:$0xff] %vm438, %v435
    %v441 = vmul.f32 %v9, 6.2831855
    %v442 = vmul.f32 %v10, 6.2831855
    %v443 = vand.u32 2147483647, %v441
    %vm444 = vcmp.le.f32.partialorder %v443, 0.7853982
    %vm445 = vcmp.lt.s32.totalorder %v441, 0
    %v446 = vand.u32 %v441, 2139095040
    %v447 = vshrl.u32 %v446, 23
    %v448 = vsub.s32 %v447, 127
    %v449 = vand.u32 2147483647, %v441
    %v450 = vand.u32 %v449, 8388607
    %v451 = vor.u32 %v450, 8388608
    %v452 = vsub.s32 0, %v451
    %v453 = vadd.s32 %v448, 1
    %vm454 = vcmp.gt.s32.totalorder %v453, 0
    %v455 = vsel %vm454, %v453, 0
    %v456 = vshrl.u32 %v455, 5
    %v457 = vand.u32 %v455, 31
    %v458 = vsub.s32 32, %v457
    %v459 = vshrl.u32 683565275, %v458
    %v460 = vshll.u32 683565275, %v457
    %v461 = vshrl.u32 2475754826, %v458
    %v462 = vor.u32 %v460, %v461
    %v463 = vshll.u32 2475754826, %v457
    %v464 = vshrl.u32 2131351028, %v458
    %v465 = vor.u32 %v463, %v464
    %v466 = vshll.u32 2131351028, %v457
    %v467 = vshrl.u32 2102212464, %v458
    %v468 = vor.u32 %v466, %v467
    %v469 = vshll.u32 2102212464, %v457
    %v470 = vshrl.u32 920167782, %v458
    %v471 = vor.u32 %v469, %v470
    %v472 = vshll.u32 920167782, %v457
    %v473 = vshrl.u32 1326507024, %v458
    %v474 = vor.u32 %v472, %v473
    %vm475 = vcmp.lt.s32.totalorder %v456, 1
    %vm476 = vcmp.lt.s32.totalorder %v456, 2
    %vm477 = vcmp.lt.s32.totalorder %v456, 3
    %vm478 = vcmp.lt.s32.totalorder %v456, 4
    %v479 = vsel %vm475, %v459, %v462
    %v480 = vsel %vm478, %v468, 2102212464
    %v481 = vsel %vm477, %v465, %v480
    %v482 = vsel %vm476, %v479, %v481
    %v483 = vsel %vm475, %v462, %v465
    %v484 = vsel %vm478, %v471, 920167782
    %v485 = vsel %vm477, %v468, %v484
    %v486 = vsel %vm476, %v483, %v485
    %v487 = vsel %vm475, %v465, %v468
    %v488 = vsel %vm478, %v474, 1326507024
    %v489 = vsel %vm477, %v471, %v488
    %v490 = vsel %vm476, %v487, %v489
    %v491 = vshll.u32 %v451, 8
    %v492 = vmul.u32.u64.compose %v491, %v490
    %v493 = vextract.low.u32 %v492
    %v494 = vextract.high.u32 %v492
    %v495 = vmul.u32.u64.compose %v491, %v486
    %v496 = vextract.low.u32 %v495
    %v497 = vextract.high.u32 %v495
    %v498 = vmul.u32 %v491, %v482
    %v499 = vadd.s32 %v494, %v496
    %vm500 = vc.u32 %v494, %v496
    %v501 = vadd.s32 %v497, 1
    %v502 = vsel %vm500, %v501, %v497
    %v503 = vadd.s32 %v498, %v502
    %v504 = vadd.s32 %v503, 536870912
    %v505 = vshrl.u32 %v504, 30
    %v506 = vshll.u32 %v505, 30
    %v507 = vsub.s32 %v503, %v506
    %vm508 = vcmp.lt.s32.totalorder %v507, 0
    %v509 = vsub.s32 0, %v507
    %v510 = vsel %vm508, %v509, %v507
    %v511 = vclz %v510
    %v512 = vsub.s32 %v511, 2
    %vm513 = vcmp.gt.s32.totalorder 0, %v512
    %v514 = vsel %vm513, 0, %v512
    %v515 = vsub.s32 32, %v514
    %v516 = vshll.u32 %v507, %v514
    %v517 = vshrl.u32 %v499, %v515
    %v518 = vor.u32 %v516, %v517
    %v519 = vsub.s32 4294967266, %v514
    %v520 = vadd.s32 %v519, 127
    %v521 = vshll.u32 %v520, 23
    %v522 = vor.u32 4788187, %v521
    %v523 = vand.u32 2147483647, %v522
    %v525 = vcvt.s32.f32 %v518
    %v526 = vmul.f32 %v525, %v523
    %v527 = vxor.u32 %v526, 2147483648
    %v528 = vsel %vm445, %v527, %v526
    %v529 = vsub.s32 4, %v505
    %v530 = vsel %vm445, %v529, %v505
    %v531 = vsel %vm444, %v441, %v528
    %v532 = vsel %vm444, 0, %v530
    %v533 = vcosq.f32.pop %v531
    %v534 = vsinq.f32.pop %v531
    %vm535 = vweird.f32 %v441
    %v536 = vadd.s32 %v532, 3
    %v537 = vand.u32 %v536, 3
    %vm538 = vcmp.lt.s32.totalorder %v537, 2
    %vm539 = vcmp.eq.s32.totalorder %v537, 0
    %v540 = vxor.u32 %v534, 2147483648
    %v541 = vsel %vm539, %v533, %v540
    %vm542 = vcmp.eq.s32.totalorder %v537, 2
    %v543 = vxor.u32 %v533, 2147483648
    %v544 = vsel %vm542, %v543, %v534
    %v545 = vsel %vm538, %v541, %v544
    %v546 = vsel %vm535, nan, %v545
    %v547 = vand.u32 2147483647, %v442
    %vm548 = vcmp.le.f32.partialorder %v547, 0.7853982
    %vm549 = vcmp.lt.s32.totalorder %v442, 0
    %v550 = vand.u32 %v442, 2139095040
    %v551 = vshrl.u32 %v550, 23
    %v552 = vsub.s32 %v551, 127
    %v553 = vand.u32 2147483647, %v442
    %v554 = vand.u32 %v553, 8388607
    %v555 = vor.u32 %v554, 8388608
    %v556 = vsub.s32 0, %v555
    %v557 = vadd.s32 %v552, 1
    %vm558 = vcmp.gt.s32.totalorder %v557, 0
    %v559 = vsel %vm558, %v557, 0
    %v560 = vshrl.u32 %v559, 5
    %v561 = vand.u32 %v559, 31
    %v562 = vsub.s32 32, %v561
    %v563 = vshrl.u32 683565275, %v562
    %v564 = vshll.u32 683565275, %v561
    %v565 = vshrl.u32 2475754826, %v562
    %v566 = vor.u32 %v564, %v565
    %v567 = vshll.u32 2475754826, %v561
    %v568 = vshrl.u32 2131351028, %v562
    %v569 = vor.u32 %v567, %v568
    %v570 = vshll.u32 2131351028, %v561
    %v571 = vshrl.u32 2102212464, %v562
    %v572 = vor.u32 %v570, %v571
    %v573 = vshll.u32 2102212464, %v561
    %v574 = vshrl.u32 920167782, %v562
    %v575 = vor.u32 %v573, %v574
    %v576 = vshll.u32 920167782, %v561
    %v577 = vshrl.u32 1326507024, %v562
    %v578 = vor.u32 %v576, %v577
    %vm579 = vcmp.lt.s32.totalorder %v560, 1
    %vm580 = vcmp.lt.s32.totalorder %v560, 2
    %vm581 = vcmp.lt.s32.totalorder %v560, 3
    %vm582 = vcmp.lt.s32.totalorder %v560, 4
    %v583 = vsel %vm579, %v563, %v566
    %v584 = vsel %vm582, %v572, 2102212464
    %v585 = vsel %vm581, %v569, %v584
    %v586 = vsel %vm580, %v583, %v585
    %v587 = vsel %vm579, %v566, %v569
    %v588 = vsel %vm582, %v575, 920167782
    %v589 = vsel %vm581, %v572, %v588
    %v590 = vsel %vm580, %v587, %v589
    %v591 = vsel %vm579, %v569, %v572
    %v592 = vsel %vm582, %v578, 1326507024
    %v593 = vsel %vm581, %v575, %v592
    %v594 = vsel %vm580, %v591, %v593
    %v595 = vshll.u32 %v555, 8
    %v596 = vmul.u32.u64.compose %v595, %v594
    %v597 = vextract.low.u32 %v596
    %v598 = vextract.high.u32 %v596
    %v599 = vmul.u32.u64.compose %v595, %v590
    %v600 = vextract.low.u32 %v599
    %v601 = vextract.high.u32 %v599
    %v602 = vmul.u32 %v595, %v586
    %v603 = vadd.s32 %v598, %v600
    %vm604 = vc.u32 %v598, %v600
    %v605 = vadd.s32 %v601, 1
    %v606 = vsel %vm604, %v605, %v601
    %v607 = vadd.s32 %v602, %v606
    %v608 = vadd.s32 %v607, 536870912
    %v609 = vshrl.u32 %v608, 30
    %v610 = vshll.u32 %v609, 30
    %v611 = vsub.s32 %v607, %v610
    %vm612 = vcmp.lt.s32.totalorder %v611, 0
    %v613 = vsub.s32 0, %v611
    %v614 = vsel %vm612, %v613, %v611
    %v615 = vclz %v614
    %v616 = vsub.s32 %v615, 2
    %vm617 = vcmp.gt.s32.totalorder 0, %v616
    %v618 = vsel %vm617, 0, %v616
    %v619 = vsub.s32 32, %v618
    %v620 = vshll.u32 %v611, %v618
    %v621 = vshrl.u32 %v603, %v619
    %v622 = vor.u32 %v620, %v621
    %v623 = vsub.s32 4294967266, %v618
    %v624 = vadd.s32 %v623, 127
    %v625 = vshll.u32 %v624, 23
    %v626 = vor.u32 4788187, %v625
    %v627 = vand.u32 2147483647, %v626
    %v629 = vcvt.s32.f32 %v622
    %v630 = vmul.f32 %v629, %v627
    %v631 = vxor.u32 %v630, 2147483648
    %v632 = vsel %vm549, %v631, %v630
    %v633 = vsub.s32 4, %v609
    %v634 = vsel %vm549, %v633, %v609
    %v635 = vsel %vm548, %v442, %v632
    %v636 = vsel %vm548, 0, %v634
    %v637 = vcosq.f32.pop %v635
    %v638 = vsinq.f32.pop %v635
    %vm639 = vweird.f32 %v442
    %v640 = vadd.s32 %v636, 3
    %v641 = vand.u32 %v640, 3
    %vm642 = vcmp.lt.s32.totalorder %v641, 2
    %vm643 = vcmp.eq.s32.totalorder %v641, 0
    %v644 = vxor.u32 %v638, 2147483648
    %v645 = vsel %vm643, %v637, %v644
    %vm646 = vcmp.eq.s32.totalorder %v641, 2
    %v647 = vxor.u32 %v637, 2147483648
    %v648 = vsel %vm646, %v647, %v638
    %v649 = vsel %vm642, %v645, %v648
    %v650 = vsel %vm639, nan, %v649
    %653 = vrot.lane.b32.xlu0 %v546, 3
    %v654 = vpop.permute.xlu0 %653
    %655 = vrot.lane.b32.xlu0 %v650, 3
    %v656 = vpop.permute.xlu0 %655
    %vm659 = vcmask 48152
    %660 = vst.msk [vmem:[#allocation2] sm:$0xff] %vm659, %v654
    %661 = vst.msk [vmem:[#allocation2 + $0x8] sm:$0xff] %vm659, %v656
    %v662 = vand.u32 2147483647, %v441
    %vm663 = vcmp.le.f32.partialorder %v662, 0.7853982
    %vm664 = vcmp.lt.s32.totalorder %v441, 0
    %v665 = vand.u32 %v441, 2139095040
    %v666 = vshrl.u32 %v665, 23
    %v667 = vsub.s32 %v666, 127
    %v668 = vand.u32 2147483647, %v441
    %v669 = vand.u32 %v668, 8388607
    %v670 = vor.u32 %v669, 8388608
    %v671 = vsub.s32 0, %v670
    %v672 = vadd.s32 %v667, 1
    %vm673 = vcmp.gt.s32.totalorder %v672, 0
    %v674 = vsel %vm673, %v672, 0
    %v675 = vshrl.u32 %v674, 5
    %v676 = vand.u32 %v674, 31
    %v677 = vsub.s32 32, %v676
    %v678 = vshrl.u32 683565275, %v677
    %v679 = vshll.u32 683565275, %v676
    %v680 = vshrl.u32 2475754826, %v677
    %v681 = vor.u32 %v679, %v680
    %v682 = vshll.u32 2475754826, %v676
    %v683 = vshrl.u32 2131351028, %v677
    %v684 = vor.u32 %v682, %v683
    %v685 = vshll.u32 2131351028, %v676
    %v686 = vshrl.u32 2102212464, %v677
    %v687 = vor.u32 %v685, %v686
    %v688 = vshll.u32 2102212464, %v676
    %v689 = vshrl.u32 920167782, %v677
    %v690 = vor.u32 %v688, %v689
    %v691 = vshll.u32 920167782, %v676
    %v692 = vshrl.u32 1326507024, %v677
    %v693 = vor.u32 %v691, %v692
    %vm694 = vcmp.lt.s32.totalorder %v675, 1
    %vm695 = vcmp.lt.s32.totalorder %v675, 2
    %vm696 = vcmp.lt.s32.totalorder %v675, 3
    %vm697 = vcmp.lt.s32.totalorder %v675, 4
    %v698 = vsel %vm694, %v678, %v681
    %v699 = vsel %vm697, %v687, 2102212464
    %v700 = vsel %vm696, %v684, %v699
    %v701 = vsel %vm695, %v698, %v700
    %v702 = vsel %vm694, %v681, %v684
    %v703 = vsel %vm697, %v690, 920167782
    %v704 = vsel %vm696, %v687, %v703
    %v705 = vsel %vm695, %v702, %v704
    %v706 = vsel %vm694, %v684, %v687
    %v707 = vsel %vm697, %v693, 1326507024
    %v708 = vsel %vm696, %v690, %v707
    %v709 = vsel %vm695, %v706, %v708
    %v710 = vshll.u32 %v670, 8
    %v711 = vmul.u32.u64.compose %v710, %v709
    %v712 = vextract.low.u32 %v711
    %v713 = vextract.high.u32 %v711
    %v714 = vmul.u32.u64.compose %v710, %v705
    %v715 = vextract.low.u32 %v714
    %v716 = vextract.high.u32 %v714
    %v717 = vmul.u32 %v710, %v701
    %v718 = vadd.s32 %v713, %v715
    %vm719 = vc.u32 %v713, %v715
    %v720 = vadd.s32 %v716, 1
    %v721 = vsel %vm719, %v720, %v716
    %v722 = vadd.s32 %v717, %v721
    %v723 = vadd.s32 %v722, 536870912
    %v724 = vshrl.u32 %v723, 30
    %v725 = vshll.u32 %v724, 30
    %v726 = vsub.s32 %v722, %v725
    %vm727 = vcmp.lt.s32.totalorder %v726, 0
    %v728 = vsub.s32 0, %v726
    %v729 = vsel %vm727, %v728, %v726
    %v730 = vclz %v729
    %v731 = vsub.s32 %v730, 2
    %vm732 = vcmp.gt.s32.totalorder 0, %v731
    %v733 = vsel %vm732, 0, %v731
    %v734 = vsub.s32 32, %v733
    %v735 = vshll.u32 %v726, %v733
    %v736 = vshrl.u32 %v718, %v734
    %v737 = vor.u32 %v735, %v736
    %v738 = vsub.s32 4294967266, %v733
    %v739 = vadd.s32 %v738, 127
    %v740 = vshll.u32 %v739, 23
    %v741 = vor.u32 4788187, %v740
    %v742 = vand.u32 2147483647, %v741
    %v744 = vcvt.s32.f32 %v737
    %v745 = vmul.f32 %v744, %v742
    %v746 = vxor.u32 %v745, 2147483648
    %v747 = vsel %vm664, %v746, %v745
    %v748 = vsub.s32 4, %v724
    %v749 = vsel %vm664, %v748, %v724
    %v750 = vsel %vm663, %v441, %v747
    %v751 = vsel %vm663, 0, %v749
    %v752 = vcosq.f32.pop %v750
    %v753 = vsinq.f32.pop %v750
    %vm754 = vweird.f32 %v441
    %v755 = vand.u32 %v751, 3
    %vm756 = vcmp.lt.s32.totalorder %v755, 2
    %vm757 = vcmp.eq.s32.totalorder %v755, 0
    %v758 = vxor.u32 %v753, 2147483648
    %v759 = vsel %vm757, %v752, %v758
    %vm760 = vcmp.eq.s32.totalorder %v755, 2
    %v761 = vxor.u32 %v752, 2147483648
    %v762 = vsel %vm760, %v761, %v753
    %v763 = vsel %vm756, %v759, %v762
    %v764 = vsel %vm754, nan, %v763
    %v765 = vand.u32 2147483647, %v442
    %vm766 = vcmp.le.f32.partialorder %v765, 0.7853982
    %vm767 = vcmp.lt.s32.totalorder %v442, 0
    %v768 = vand.u32 %v442, 2139095040
    %v769 = vshrl.u32 %v768, 23
    %v770 = vsub.s32 %v769, 127
    %v771 = vand.u32 2147483647, %v442
    %v772 = vand.u32 %v771, 8388607
    %v773 = vor.u32 %v772, 8388608
    %v774 = vsub.s32 0, %v773
    %v775 = vadd.s32 %v770, 1
    %vm776 = vcmp.gt.s32.totalorder %v775, 0
    %v777 = vsel %vm776, %v775, 0
    %v778 = vshrl.u32 %v777, 5
    %v779 = vand.u32 %v777, 31
    %v780 = vsub.s32 32, %v779
    %v781 = vshrl.u32 683565275, %v780
    %v782 = vshll.u32 683565275, %v779
    %v783 = vshrl.u32 2475754826, %v780
    %v784 = vor.u32 %v782, %v783
    %v785 = vshll.u32 2475754826, %v779
    %v786 = vshrl.u32 2131351028, %v780
    %v787 = vor.u32 %v785, %v786
    %v788 = vshll.u32 2131351028, %v779
    %v789 = vshrl.u32 2102212464, %v780
    %v790 = vor.u32 %v788, %v789
    %v791 = vshll.u32 2102212464, %v779
    %v792 = vshrl.u32 920167782, %v780
    %v793 = vor.u32 %v791, %v792
    %v794 = vshll.u32 920167782, %v779
    %v795 = vshrl.u32 1326507024, %v780
    %v796 = vor.u32 %v794, %v795
    %vm797 = vcmp.lt.s32.totalorder %v778, 1
    %vm798 = vcmp.lt.s32.totalorder %v778, 2
    %vm799 = vcmp.lt.s32.totalorder %v778, 3
    %vm800 = vcmp.lt.s32.totalorder %v778, 4
    %v801 = vsel %vm797, %v781, %v784
    %v802 = vsel %vm800, %v790, 2102212464
    %v803 = vsel %vm799, %v787, %v802
    %v804 = vsel %vm798, %v801, %v803
    %v805 = vsel %vm797, %v784, %v787
    %v806 = vsel %vm800, %v793, 920167782
    %v807 = vsel %vm799, %v790, %v806
    %v808 = vsel %vm798, %v805, %v807
    %v809 = vsel %vm797, %v787, %v790
    %v810 = vsel %vm800, %v796, 1326507024
    %v811 = vsel %vm799, %v793, %v810
    %v812 = vsel %vm798, %v809, %v811
    %v813 = vshll.u32 %v773, 8
    %v814 = vmul.u32.u64.compose %v813, %v812
    %v815 = vextract.low.u32 %v814
    %v816 = vextract.high.u32 %v814
    %v817 = vmul.u32.u64.compose %v813, %v808
    %v818 = vextract.low.u32 %v817
    %v819 = vextract.high.u32 %v817
    %v820 = vmul.u32 %v813, %v804
    %v821 = vadd.s32 %v816, %v818
    %vm822 = vc.u32 %v816, %v818
    %v823 = vadd.s32 %v819, 1
    %v824 = vsel %vm822, %v823, %v819
    %v825 = vadd.s32 %v820, %v824
    %v826 = vadd.s32 %v825, 536870912
    %v827 = vshrl.u32 %v826, 30
    %v828 = vshll.u32 %v827, 30
    %v829 = vsub.s32 %v825, %v828
    %vm830 = vcmp.lt.s32.totalorder %v829, 0
    %v831 = vsub.s32 0, %v829
    %v832 = vsel %vm830, %v831, %v829
    %v833 = vclz %v832
    %v834 = vsub.s32 %v833, 2
    %vm835 = vcmp.gt.s32.totalorder 0, %v834
    %v836 = vsel %vm835, 0, %v834
    %v837 = vsub.s32 32, %v836
    %v838 = vshll.u32 %v829, %v836
    %v839 = vshrl.u32 %v821, %v837
    %v840 = vor.u32 %v838, %v839
    %v841 = vsub.s32 4294967266, %v836
    %v842 = vadd.s32 %v841, 127
    %v843 = vshll.u32 %v842, 23
    %v844 = vor.u32 4788187, %v843
    %v845 = vand.u32 2147483647, %v844
    %v847 = vcvt.s32.f32 %v840
    %v848 = vmul.f32 %v847, %v845
    %v849 = vxor.u32 %v848, 2147483648
    %v850 = vsel %vm767, %v849, %v848
    %v851 = vsub.s32 4, %v827
    %v852 = vsel %vm767, %v851, %v827
    %v853 = vsel %vm766, %v442, %v850
    %v854 = vsel %vm766, 0, %v852
    %v855 = vcosq.f32.pop %v853
    %v856 = vsinq.f32.pop %v853
    %vm857 = vweird.f32 %v442
    %v858 = vand.u32 %v854, 3
    %vm859 = vcmp.lt.s32.totalorder %v858, 2
    %vm860 = vcmp.eq.s32.totalorder %v858, 0
    %v861 = vxor.u32 %v856, 2147483648
    %v862 = vsel %vm860, %v855, %v861
    %vm863 = vcmp.eq.s32.totalorder %v858, 2
    %v864 = vxor.u32 %v855, 2147483648
    %v865 = vsel %vm863, %v864, %v856
    %v866 = vsel %vm859, %v862, %v865
    %v867 = vsel %vm857, nan, %v866
    %870 = vrot.lane.b32.xlu0 %v764, 15
    %v871 = vpop.permute.xlu0 %870
    %872 = vrot.lane.b32.xlu0 %v867, 15
    %v873 = vpop.permute.xlu0 %872
    %vm876 = vcmask 146552
    %877 = vst.msk [vmem:[#allocation2] sm:$0xff] %vm876, %v871
    %878 = vst.msk [vmem:[#allocation2 + $0x8] sm:$0xff] %vm876, %v873
    %v879 = vmul.f32 %v9, 12.566371
    %v880 = vmul.f32 %v10, 12.566371
    %v881 = vand.u32 2147483647, %v879
    %vm882 = vcmp.le.f32.partialorder %v881, 0.7853982
    %vm883 = vcmp.lt.s32.totalorder %v879, 0
    %v884 = vand.u32 %v879, 2139095040
    %v885 = vshrl.u32 %v884, 23
    %v886 = vsub.s32 %v885, 127
    %v887 = vand.u32 2147483647, %v879
    %v888 = vand.u32 %v887, 8388607
    %v889 = vor.u32 %v888, 8388608
    %v890 = vsub.s32 0, %v889
    %v891 = vadd.s32 %v886, 1
    %vm892 = vcmp.gt.s32.totalorder %v891, 0
    %v893 = vsel %vm892, %v891, 0
    %v894 = vshrl.u32 %v893, 5
    %v895 = vand.u32 %v893, 31
    %v896 = vsub.s32 32, %v895
    %v897 = vshrl.u32 683565275, %v896
    %v898 = vshll.u32 683565275, %v895
    %v899 = vshrl.u32 2475754826, %v896
    %v900 = vor.u32 %v898, %v899
    %v901 = vshll.u32 2475754826, %v895
    %v902 = vshrl.u32 2131351028, %v896
    %v903 = vor.u32 %v901, %v902
    %v904 = vshll.u32 2131351028, %v895
    %v905 = vshrl.u32 2102212464, %v896
    %v906 = vor.u32 %v904, %v905
    %v907 = vshll.u32 2102212464, %v895
    %v908 = vshrl.u32 920167782, %v896
    %v909 = vor.u32 %v907, %v908
    %v910 = vshll.u32 920167782, %v895
    %v911 = vshrl.u32 1326507024, %v896
    %v912 = vor.u32 %v910, %v911
    %vm913 = vcmp.lt.s32.totalorder %v894, 1
    %vm914 = vcmp.lt.s32.totalorder %v894, 2
    %vm915 = vcmp.lt.s32.totalorder %v894, 3
    %vm916 = vcmp.lt.s32.totalorder %v894, 4
    %v917 = vsel %vm913, %v897, %v900
    %v918 = vsel %vm916, %v906, 2102212464
    %v919 = vsel %vm915, %v903, %v918
    %v920 = vsel %vm914, %v917, %v919
    %v921 = vsel %vm913, %v900, %v903
    %v922 = vsel %vm916, %v909, 920167782
    %v923 = vsel %vm915, %v906, %v922
    %v924 = vsel %vm914, %v921, %v923
    %v925 = vsel %vm913, %v903, %v906
    %v926 = vsel %vm916, %v912, 1326507024
    %v927 = vsel %vm915, %v909, %v926
    %v928 = vsel %vm914, %v925, %v927
    %v929 = vshll.u32 %v889, 8
    %v930 = vmul.u32.u64.compose %v929, %v928
    %v931 = vextract.low.u32 %v930
    %v932 = vextract.high.u32 %v930
    %v933 = vmul.u32.u64.compose %v929, %v924
    %v934 = vextract.low.u32 %v933
    %v935 = vextract.high.u32 %v933
    %v936 = vmul.u32 %v929, %v920
    %v937 = vadd.s32 %v932, %v934
    %vm938 = vc.u32 %v932, %v934
    %v939 = vadd.s32 %v935, 1
    %v940 = vsel %vm938, %v939, %v935
    %v941 = vadd.s32 %v936, %v940
    %v942 = vadd.s32 %v941, 536870912
    %v943 = vshrl.u32 %v942, 30
    %v944 = vshll.u32 %v943, 30
    %v945 = vsub.s32 %v941, %v944
    %vm946 = vcmp.lt.s32.totalorder %v945, 0
    %v947 = vsub.s32 0, %v945
    %v948 = vsel %vm946, %v947, %v945
    %v949 = vclz %v948
    %v950 = vsub.s32 %v949, 2
    %vm951 = vcmp.gt.s32.totalorder 0, %v950
    %v952 = vsel %vm951, 0, %v950
    %v953 = vsub.s32 32, %v952
    %v954 = vshll.u32 %v945, %v952
    %v955 = vshrl.u32 %v937, %v953
    %v956 = vor.u32 %v954, %v955
    %v957 = vsub.s32 4294967266, %v952
    %v958 = vadd.s32 %v957, 127
    %v959 = vshll.u32 %v958, 23
    %v960 = vor.u32 4788187, %v959
    %v961 = vand.u32 2147483647, %v960
    %v963 = vcvt.s32.f32 %v956
    %v964 = vmul.f32 %v963, %v961
    %v965 = vxor.u32 %v964, 2147483648
    %v966 = vsel %vm883, %v965, %v964
    %v967 = vsub.s32 4, %v943
    %v968 = vsel %vm883, %v967, %v943
    %v969 = vsel %vm882, %v879, %v966
    %v970 = vsel %vm882, 0, %v968
    %v971 = vcosq.f32.pop %v969
    %v972 = vsinq.f32.pop %v969
    %vm973 = vweird.f32 %v879
    %v974 = vadd.s32 %v970, 3
    %v975 = vand.u32 %v974, 3
    %vm976 = vcmp.lt.s32.totalorder %v975, 2
    %vm977 = vcmp.eq.s32.totalorder %v975, 0
    %v978 = vxor.u32 %v972, 2147483648
    %v979 = vsel %vm977, %v971, %v978
    %vm980 = vcmp.eq.s32.totalorder %v975, 2
    %v981 = vxor.u32 %v971, 2147483648
    %v982 = vsel %vm980, %v981, %v972
    %v983 = vsel %vm976, %v979, %v982
    %v984 = vsel %vm973, nan, %v983
    %v985 = vand.u32 2147483647, %v880
    %vm986 = vcmp.le.f32.partialorder %v985, 0.7853982
    %vm987 = vcmp.lt.s32.totalorder %v880, 0
    %v988 = vand.u32 %v880, 2139095040
    %v989 = vshrl.u32 %v988, 23
    %v990 = vsub.s32 %v989, 127
    %v991 = vand.u32 2147483647, %v880
    %v992 = vand.u32 %v991, 8388607
    %v993 = vor.u32 %v992, 8388608
    %v994 = vsub.s32 0, %v993
    %v995 = vadd.s32 %v990, 1
    %vm996 = vcmp.gt.s32.totalorder %v995, 0
    %v997 = vsel %vm996, %v995, 0
    %v998 = vshrl.u32 %v997, 5
    %v999 = vand.u32 %v997, 31
    %v1000 = vsub.s32 32, %v999
    %v1001 = vshrl.u32 683565275, %v1000
    %v1002 = vshll.u32 683565275, %v999
    %v1003 = vshrl.u32 2475754826, %v1000
    %v1004 = vor.u32 %v1002, %v1003
    %v1005 = vshll.u32 2475754826, %v999
    %v1006 = vshrl.u32 2131351028, %v1000
    %v1007 = vor.u32 %v1005, %v1006
    %v1008 = vshll.u32 2131351028, %v999
    %v1009 = vshrl.u32 2102212464, %v1000
    %v1010 = vor.u32 %v1008, %v1009
    %v1011 = vshll.u32 2102212464, %v999
    %v1012 = vshrl.u32 920167782, %v1000
    %v1013 = vor.u32 %v1011, %v1012
    %v1014 = vshll.u32 920167782, %v999
    %v1015 = vshrl.u32 1326507024, %v1000
    %v1016 = vor.u32 %v1014, %v1015
    %vm1017 = vcmp.lt.s32.totalorder %v998, 1
    %vm1018 = vcmp.lt.s32.totalorder %v998, 2
    %vm1019 = vcmp.lt.s32.totalorder %v998, 3
    %vm1020 = vcmp.lt.s32.totalorder %v998, 4
    %v1021 = vsel %vm1017, %v1001, %v1004
    %v1022 = vsel %vm1020, %v1010, 2102212464
    %v1023 = vsel %vm1019, %v1007, %v1022
    %v1024 = vsel %vm1018, %v1021, %v1023
    %v1025 = vsel %vm1017, %v1004, %v1007
    %v1026 = vsel %vm1020, %v1013, 920167782
    %v1027 = vsel %vm1019, %v1010, %v1026
    %v1028 = vsel %vm1018, %v1025, %v1027
    %v1029 = vsel %vm1017, %v1007, %v1010
    %v1030 = vsel %vm1020, %v1016, 1326507024
    %v1031 = vsel %vm1019, %v1013, %v1030
    %v1032 = vsel %vm1018, %v1029, %v1031
    %v1033 = vshll.u32 %v993, 8
    %v1034 = vmul.u32.u64.compose %v1033, %v1032
    %v1035 = vextract.low.u32 %v1034
    %v1036 = vextract.high.u32 %v1034
    %v1037 = vmul.u32.u64.compose %v1033, %v1028
    %v1038 = vextract.low.u32 %v1037
    %v1039 = vextract.high.u32 %v1037
    %v1040 = vmul.u32 %v1033, %v1024
    %v1041 = vadd.s32 %v1036, %v1038
    %vm1042 = vc.u32 %v1036, %v1038
    %v1043 = vadd.s32 %v1039, 1
    %v1044 = vsel %vm1042, %v1043, %v1039
    %v1045 = vadd.s32 %v1040, %v1044
    %v1046 = vadd.s32 %v1045, 536870912
    %v1047 = vshrl.u32 %v1046, 30
    %v1048 = vshll.u32 %v1047, 30
    %v1049 = vsub.s32 %v1045, %v1048
    %vm1050 = vcmp.lt.s32.totalorder %v1049, 0
    %v1051 = vsub.s32 0, %v1049
    %v1052 = vsel %vm1050, %v1051, %v1049
    %v1053 = vclz %v1052
    %v1054 = vsub.s32 %v1053, 2
    %vm1055 = vcmp.gt.s32.totalorder 0, %v1054
    %v1056 = vsel %vm1055, 0, %v1054
    %v1057 = vsub.s32 32, %v1056
    %v1058 = vshll.u32 %v1049, %v1056
    %v1059 = vshrl.u32 %v1041, %v1057
    %v1060 = vor.u32 %v1058, %v1059
    %v1061 = vsub.s32 4294967266, %v1056
    %v1062 = vadd.s32 %v1061, 127
    %v1063 = vshll.u32 %v1062, 23
    %v1064 = vor.u32 4788187, %v1063
    %v1065 = vand.u32 2147483647, %v1064
    %v1067 = vcvt.s32.f32 %v1060
    %v1068 = vmul.f32 %v1067, %v1065
    %v1069 = vxor.u32 %v1068, 2147483648
    %v1070 = vsel %vm987, %v1069, %v1068
    %v1071 = vsub.s32 4, %v1047
    %v1072 = vsel %vm987, %v1071, %v1047
    %v1073 = vsel %vm986, %v880, %v1070
    %v1074 = vsel %vm986, 0, %v1072
    %v1075 = vcosq.f32.pop %v1073
    %v1076 = vsinq.f32.pop %v1073
    %vm1077 = vweird.f32 %v880
    %v1078 = vadd.s32 %v1074, 3
    %v1079 = vand.u32 %v1078, 3
    %vm1080 = vcmp.lt.s32.totalorder %v1079, 2
    %vm1081 = vcmp.eq.s32.totalorder %v1079, 0
    %v1082 = vxor.u32 %v1076, 2147483648
    %v1083 = vsel %vm1081, %v1075, %v1082
    %vm1084 = vcmp.eq.s32.totalorder %v1079, 2
    %v1085 = vxor.u32 %v1075, 2147483648
    %v1086 = vsel %vm1084, %v1085, %v1076
    %v1087 = vsel %vm1080, %v1083, %v1086
    %v1088 = vsel %vm1077, nan, %v1087
    %1091 = vrot.lane.b32.xlu0 %v984, 6
    %v1092 = vpop.permute.xlu0 %1091
    %1093 = vrot.lane.b32.xlu0 %v1088, 6
    %v1094 = vpop.permute.xlu0 %1093
    %vm1097 = vcmask 72752
    %1098 = vst.msk [vmem:[#allocation2] sm:$0xff] %vm1097, %v1092
    %1099 = vst.msk [vmem:[#allocation2 + $0x8] sm:$0xff] %vm1097, %v1094
    %v1100 = vand.u32 2147483647, %v879
    %vm1101 = vcmp.le.f32.partialorder %v1100, 0.7853982
    %vm1102 = vcmp.lt.s32.totalorder %v879, 0
    %v1103 = vand.u32 %v879, 2139095040
    %v1104 = vshrl.u32 %v1103, 23
    %v1105 = vsub.s32 %v1104, 127
    %v1106 = vand.u32 2147483647, %v879
    %v1107 = vand.u32 %v1106, 8388607
    %v1108 = vor.u32 %v1107, 8388608
    %v1109 = vsub.s32 0, %v1108
    %v1110 = vadd.s32 %v1105, 1
    %vm1111 = vcmp.gt.s32.totalorder %v1110, 0
    %v1112 = vsel %vm1111, %v1110, 0
    %v1113 = vshrl.u32 %v1112, 5
    %v1114 = vand.u32 %v1112, 31
    %v1115 = vsub.s32 32, %v1114
    %v1116 = vshrl.u32 683565275, %v1115
    %v1117 = vshll.u32 683565275, %v1114
    %v1118 = vshrl.u32 2475754826, %v1115
    %v1119 = vor.u32 %v1117, %v1118
    %v1120 = vshll.u32 2475754826, %v1114
    %v1121 = vshrl.u32 2131351028, %v1115
    %v1122 = vor.u32 %v1120, %v1121
    %v1123 = vshll.u32 2131351028, %v1114
    %v1124 = vshrl.u32 2102212464, %v1115
    %v1125 = vor.u32 %v1123, %v1124
    %v1126 = vshll.u32 2102212464, %v1114
    %v1127 = vshrl.u32 920167782, %v1115
    %v1128 = vor.u32 %v1126, %v1127
    %v1129 = vshll.u32 920167782, %v1114
    %v1130 = vshrl.u32 1326507024, %v1115
    %v1131 = vor.u32 %v1129, %v1130
    %vm1132 = vcmp.lt.s32.totalorder %v1113, 1
    %vm1133 = vcmp.lt.s32.totalorder %v1113, 2
    %vm1134 = vcmp.lt.s32.totalorder %v1113, 3
    %vm1135 = vcmp.lt.s32.totalorder %v1113, 4
    %v1136 = vsel %vm1132, %v1116, %v1119
    %v1137 = vsel %vm1135, %v1125, 2102212464
    %v1138 = vsel %vm1134, %v1122, %v1137
    %v1139 = vsel %vm1133, %v1136, %v1138
    %v1140 = vsel %vm1132, %v1119, %v1122
    %v1141 = vsel %vm1135, %v1128, 920167782
    %v1142 = vsel %vm1134, %v1125, %v1141
    %v1143 = vsel %vm1133, %v1140, %v1142
    %v1144 = vsel %vm1132, %v1122, %v1125
    %v1145 = vsel %vm1135, %v1131, 1326507024
    %v1146 = vsel %vm1134, %v1128, %v1145
    %v1147 = vsel %vm1133, %v1144, %v1146
    %v1148 = vshll.u32 %v1108, 8
    %v1149 = vmul.u32.u64.compose %v1148, %v1147
    %v1150 = vextract.low.u32 %v1149
    %v1151 = vextract.high.u32 %v1149
    %v1152 = vmul.u32.u64.compose %v1148, %v1143
    %v1153 = vextract.low.u32 %v1152
    %v1154 = vextract.high.u32 %v1152
    %v1155 = vmul.u32 %v1148, %v1139
    %v1156 = vadd.s32 %v1151, %v1153
    %vm1157 = vc.u32 %v1151, %v1153
    %v1158 = vadd.s32 %v1154, 1
    %v1159 = vsel %vm1157, %v1158, %v1154
    %v1160 = vadd.s32 %v1155, %v1159
    %v1161 = vadd.s32 %v1160, 536870912
    %v1162 = vshrl.u32 %v1161, 30
    %v1163 = vshll.u32 %v1162, 30
    %v1164 = vsub.s32 %v1160, %v1163
    %vm1165 = vcmp.lt.s32.totalorder %v1164, 0
    %v1166 = vsub.s32 0, %v1164
    %v1167 = vsel %vm1165, %v1166, %v1164
    %v1168 = vclz %v1167
    %v1169 = vsub.s32 %v1168, 2
    %vm1170 = vcmp.gt.s32.totalorder 0, %v1169
    %v1171 = vsel %vm1170, 0, %v1169
    %v1172 = vsub.s32 32, %v1171
    %v1173 = vshll.u32 %v1164, %v1171
    %v1174 = vshrl.u32 %v1156, %v1172
    %v1175 = vor.u32 %v1173, %v1174
    %v1176 = vsub.s32 4294967266, %v1171
    %v1177 = vadd.s32 %v1176, 127
    %v1178 = vshll.u32 %v1177, 23
    %v1179 = vor.u32 4788187, %v1178
    %v1180 = vand.u32 2147483647, %v1179
    %v1182 = vcvt.s32.f32 %v1175
    %v1183 = vmul.f32 %v1182, %v1180
    %v1184 = vxor.u32 %v1183, 2147483648
    %v1185 = vsel %vm1102, %v1184, %v1183
    %v1186 = vsub.s32 4, %v1162
    %v1187 = vsel %vm1102, %v1186, %v1162
    %v1188 = vsel %vm1101, %v879, %v1185
    %v1189 = vsel %vm1101, 0, %v1187
    %v1190 = vcosq.f32.pop %v1188
    %v1191 = vsinq.f32.pop %v1188
    %vm1192 = vweird.f32 %v879
    %v1193 = vand.u32 %v1189, 3
    %vm1194 = vcmp.lt.s32.totalorder %v1193, 2
    %vm1195 = vcmp.eq.s32.totalorder %v1193, 0
    %v1196 = vxor.u32 %v1191, 2147483648
    %v1197 = vsel %vm1195, %v1190, %v1196
    %vm1198 = vcmp.eq.s32.totalorder %v1193, 2
    %v1199 = vxor.u32 %v1190, 2147483648
    %v1200 = vsel %vm1198, %v1199, %v1191
    %v1201 = vsel %vm1194, %v1197, %v1200
    %v1202 = vsel %vm1192, nan, %v1201
    %v1203 = vand.u32 2147483647, %v880
    %vm1204 = vcmp.le.f32.partialorder %v1203, 0.7853982
    %vm1205 = vcmp.lt.s32.totalorder %v880, 0
    %v1206 = vand.u32 %v880, 2139095040
    %v1207 = vshrl.u32 %v1206, 23
    %v1208 = vsub.s32 %v1207, 127
    %v1209 = vand.u32 2147483647, %v880
    %v1210 = vand.u32 %v1209, 8388607
    %v1211 = vor.u32 %v1210, 8388608
    %v1212 = vsub.s32 0, %v1211
    %v1213 = vadd.s32 %v1208, 1
    %vm1214 = vcmp.gt.s32.totalorder %v1213, 0
    %v1215 = vsel %vm1214, %v1213, 0
    %v1216 = vshrl.u32 %v1215, 5
    %v1217 = vand.u32 %v1215, 31
    %v1218 = vsub.s32 32, %v1217
    %v1219 = vshrl.u32 683565275, %v1218
    %v1220 = vshll.u32 683565275, %v1217
    %v1221 = vshrl.u32 2475754826, %v1218
    %v1222 = vor.u32 %v1220, %v1221
    %v1223 = vshll.u32 2475754826, %v1217
    %v1224 = vshrl.u32 2131351028, %v1218
    %v1225 = vor.u32 %v1223, %v1224
    %v1226 = vshll.u32 2131351028, %v1217
    %v1227 = vshrl.u32 2102212464, %v1218
    %v1228 = vor.u32 %v1226, %v1227
    %v1229 = vshll.u32 2102212464, %v1217
    %v1230 = vshrl.u32 920167782, %v1218
    %v1231 = vor.u32 %v1229, %v1230
    %v1232 = vshll.u32 920167782, %v1217
    %v1233 = vshrl.u32 1326507024, %v1218
    %v1234 = vor.u32 %v1232, %v1233
    %vm1235 = vcmp.lt.s32.totalorder %v1216, 1
    %vm1236 = vcmp.lt.s32.totalorder %v1216, 2
    %vm1237 = vcmp.lt.s32.totalorder %v1216, 3
    %vm1238 = vcmp.lt.s32.totalorder %v1216, 4
    %v1239 = vsel %vm1235, %v1219, %v1222
    %v1240 = vsel %vm1238, %v1228, 2102212464
    %v1241 = vsel %vm1237, %v1225, %v1240
    %v1242 = vsel %vm1236, %v1239, %v1241
    %v1243 = vsel %vm1235, %v1222, %v1225
    %v1244 = vsel %vm1238, %v1231, 920167782
    %v1245 = vsel %vm1237, %v1228, %v1244
    %v1246 = vsel %vm1236, %v1243, %v1245
    %v1247 = vsel %vm1235, %v1225, %v1228
    %v1248 = vsel %vm1238, %v1234, 1326507024
    %v1249 = vsel %vm1237, %v1231, %v1248
    %v1250 = vsel %vm1236, %v1247, %v1249
    %v1251 = vshll.u32 %v1211, 8
    %v1252 = vmul.u32.u64.compose %v1251, %v1250
    %v1253 = vextract.low.u32 %v1252
    %v1254 = vextract.high.u32 %v1252
    %v1255 = vmul.u32.u64.compose %v1251, %v1246
    %v1256 = vextract.low.u32 %v1255
    %v1257 = vextract.high.u32 %v1255
    %v1258 = vmul.u32 %v1251, %v1242
    %v1259 = vadd.s32 %v1254, %v1256
    %vm1260 = vc.u32 %v1254, %v1256
    %v1261 = vadd.s32 %v1257, 1
    %v1262 = vsel %vm1260, %v1261, %v1257
    %v1263 = vadd.s32 %v1258, %v1262
    %v1264 = vadd.s32 %v1263, 536870912
    %v1265 = vshrl.u32 %v1264, 30
    %v1266 = vshll.u32 %v1265, 30
    %v1267 = vsub.s32 %v1263, %v1266
    %vm1268 = vcmp.lt.s32.totalorder %v1267, 0
    %v1269 = vsub.s32 0, %v1267
    %v1270 = vsel %vm1268, %v1269, %v1267
    %v1271 = vclz %v1270
    %v1272 = vsub.s32 %v1271, 2
    %vm1273 = vcmp.gt.s32.totalorder 0, %v1272
    %v1274 = vsel %vm1273, 0, %v1272
    %v1275 = vsub.s32 32, %v1274
    %v1276 = vshll.u32 %v1267, %v1274
    %v1277 = vshrl.u32 %v1259, %v1275
    %v1278 = vor.u32 %v1276, %v1277
    %v1279 = vsub.s32 4294967266, %v1274
    %v1280 = vadd.s32 %v1279, 127
    %v1281 = vshll.u32 %v1280, 23
    %v1282 = vor.u32 4788187, %v1281
    %v1283 = vand.u32 2147483647, %v1282
    %v1285 = vcvt.s32.f32 %v1278
    %v1286 = vmul.f32 %v1285, %v1283
    %v1287 = vxor.u32 %v1286, 2147483648
    %v1288 = vsel %vm1205, %v1287, %v1286
    %v1289 = vsub.s32 4, %v1265
    %v1290 = vsel %vm1205, %v1289, %v1265
    %v1291 = vsel %vm1204, %v880, %v1288
    %v1292 = vsel %vm1204, 0, %v1290
    %v1293 = vcosq.f32.pop %v1291
    %v1294 = vsinq.f32.pop %v1291
    %vm1295 = vweird.f32 %v880
    %v1296 = vand.u32 %v1292, 3
    %vm1297 = vcmp.lt.s32.totalorder %v1296, 2
    %vm1298 = vcmp.eq.s32.totalorder %v1296, 0
    %v1299 = vxor.u32 %v1294, 2147483648
    %v1300 = vsel %vm1298, %v1293, %v1299
    %vm1301 = vcmp.eq.s32.totalorder %v1296, 2
    %v1302 = vxor.u32 %v1293, 2147483648
    %v1303 = vsel %vm1301, %v1302, %v1294
    %v1304 = vsel %vm1297, %v1300, %v1303
    %v1305 = vsel %vm1295, nan, %v1304
    %1308 = vrot.lane.b32.xlu0 %v1202, 18
    %v1309 = vpop.permute.xlu0 %1308
    %1310 = vrot.lane.b32.xlu0 %v1305, 18
    %v1311 = vpop.permute.xlu0 %1310
    %vm1314 = vcmask 171152
    %1315 = vst.msk [vmem:[#allocation2] sm:$0xff] %vm1314, %v1309
    %1316 = vst.msk [vmem:[#allocation2 + $0x8] sm:$0xff] %vm1314, %v1311
    %v1317 = vmul.f32 %v9, 18.849556
    %v1318 = vmul.f32 %v10, 18.849556
    %v1319 = vand.u32 2147483647, %v1317
    %vm1320 = vcmp.le.f32.partialorder %v1319, 0.7853982
    %vm1321 = vcmp.lt.s32.totalorder %v1317, 0
    %v1322 = vand.u32 %v1317, 2139095040
    %v1323 = vshrl.u32 %v1322, 23
    %v1324 = vsub.s32 %v1323, 127
    %v1325 = vand.u32 2147483647, %v1317
    %v1326 = vand.u32 %v1325, 8388607
    %v1327 = vor.u32 %v1326, 8388608
    %v1328 = vsub.s32 0, %v1327
    %v1329 = vadd.s32 %v1324, 1
    %vm1330 = vcmp.gt.s32.totalorder %v1329, 0
    %v1331 = vsel %vm1330, %v1329, 0
    %v1332 = vshrl.u32 %v1331, 5
    %v1333 = vand.u32 %v1331, 31
    %v1334 = vsub.s32 32, %v1333
    %v1335 = vshrl.u32 683565275, %v1334
    %v1336 = vshll.u32 683565275, %v1333
    %v1337 = vshrl.u32 2475754826, %v1334
    %v1338 = vor.u32 %v1336, %v1337
    %v1339 = vshll.u32 2475754826, %v1333
    %v1340 = vshrl.u32 2131351028, %v1334
    %v1341 = vor.u32 %v1339, %v1340
    %v1342 = vshll.u32 2131351028, %v1333
    %v1343 = vshrl.u32 2102212464, %v1334
    %v1344 = vor.u32 %v1342, %v1343
    %v1345 = vshll.u32 2102212464, %v1333
    %v1346 = vshrl.u32 920167782, %v1334
    %v1347 = vor.u32 %v1345, %v1346
    %v1348 = vshll.u32 920167782, %v1333
    %v1349 = vshrl.u32 1326507024, %v1334
    %v1350 = vor.u32 %v1348, %v1349
    %vm1351 = vcmp.lt.s32.totalorder %v1332, 1
    %vm1352 = vcmp.lt.s32.totalorder %v1332, 2
    %vm1353 = vcmp.lt.s32.totalorder %v1332, 3
    %vm1354 = vcmp.lt.s32.totalorder %v1332, 4
    %v1355 = vsel %vm1351, %v1335, %v1338
    %v1356 = vsel %vm1354, %v1344, 2102212464
    %v1357 = vsel %vm1353, %v1341, %v1356
    %v1358 = vsel %vm1352, %v1355, %v1357
    %v1359 = vsel %vm1351, %v1338, %v1341
    %v1360 = vsel %vm1354, %v1347, 920167782
    %v1361 = vsel %vm1353, %v1344, %v1360
    %v1362 = vsel %vm1352, %v1359, %v1361
    %v1363 = vsel %vm1351, %v1341, %v1344
    %v1364 = vsel %vm1354, %v1350, 1326507024
    %v1365 = vsel %vm1353, %v1347, %v1364
    %v1366 = vsel %vm1352, %v1363, %v1365
    %v1367 = vshll.u32 %v1327, 8
    %v1368 = vmul.u32.u64.compose %v1367, %v1366
    %v1369 = vextract.low.u32 %v1368
    %v1370 = vextract.high.u32 %v1368
    %v1371 = vmul.u32.u64.compose %v1367, %v1362
    %v1372 = vextract.low.u32 %v1371
    %v1373 = vextract.high.u32 %v1371
    %v1374 = vmul.u32 %v1367, %v1358
    %v1375 = vadd.s32 %v1370, %v1372
    %vm1376 = vc.u32 %v1370, %v1372
    %v1377 = vadd.s32 %v1373, 1
    %v1378 = vsel %vm1376, %v1377, %v1373
    %v1379 = vadd.s32 %v1374, %v1378
    %v1380 = vadd.s32 %v1379, 536870912
    %v1381 = vshrl.u32 %v1380, 30
    %v1382 = vshll.u32 %v1381, 30
    %v1383 = vsub.s32 %v1379, %v1382
    %vm1384 = vcmp.lt.s32.totalorder %v1383, 0
    %v1385 = vsub.s32 0, %v1383
    %v1386 = vsel %vm1384, %v1385, %v1383
    %v1387 = vclz %v1386
    %v1388 = vsub.s32 %v1387, 2
    %vm1389 = vcmp.gt.s32.totalorder 0, %v1388
    %v1390 = vsel %vm1389, 0, %v1388
    %v1391 = vsub.s32 32, %v1390
    %v1392 = vshll.u32 %v1383, %v1390
    %v1393 = vshrl.u32 %v1375, %v1391
    %v1394 = vor.u32 %v1392, %v1393
    %v1395 = vsub.s32 4294967266, %v1390
    %v1396 = vadd.s32 %v1395, 127
    %v1397 = vshll.u32 %v1396, 23
    %v1398 = vor.u32 4788187, %v1397
    %v1399 = vand.u32 2147483647, %v1398
    %v1401 = vcvt.s32.f32 %v1394
    %v1402 = vmul.f32 %v1401, %v1399
    %v1403 = vxor.u32 %v1402, 2147483648
    %v1404 = vsel %vm1321, %v1403, %v1402
    %v1405 = vsub.s32 4, %v1381
    %v1406 = vsel %vm1321, %v1405, %v1381
    %v1407 = vsel %vm1320, %v1317, %v1404
    %v1408 = vsel %vm1320, 0, %v1406
    %v1409 = vcosq.f32.pop %v1407
    %v1410 = vsinq.f32.pop %v1407
    %vm1411 = vweird.f32 %v1317
    %v1412 = vadd.s32 %v1408, 3
    %v1413 = vand.u32 %v1412, 3
    %vm1414 = vcmp.lt.s32.totalorder %v1413, 2
    %vm1415 = vcmp.eq.s32.totalorder %v1413, 0
    %v1416 = vxor.u32 %v1410, 2147483648
    %v1417 = vsel %vm1415, %v1409, %v1416
    %vm1418 = vcmp.eq.s32.totalorder %v1413, 2
    %v1419 = vxor.u32 %v1409, 2147483648
    %v1420 = vsel %vm1418, %v1419, %v1410
    %v1421 = vsel %vm1414, %v1417, %v1420
    %v1422 = vsel %vm1411, nan, %v1421
    %v1423 = vand.u32 2147483647, %v1318
    %vm1424 = vcmp.le.f32.partialorder %v1423, 0.7853982
    %vm1425 = vcmp.lt.s32.totalorder %v1318, 0
    %v1426 = vand.u32 %v1318, 2139095040
    %v1427 = vshrl.u32 %v1426, 23
    %v1428 = vsub.s32 %v1427, 127
    %v1429 = vand.u32 2147483647, %v1318
    %v1430 = vand.u32 %v1429, 8388607
    %v1431 = vor.u32 %v1430, 8388608
    %v1432 = vsub.s32 0, %v1431
    %v1433 = vadd.s32 %v1428, 1
    %vm1434 = vcmp.gt.s32.totalorder %v1433, 0
    %v1435 = vsel %vm1434, %v1433, 0
    %v1436 = vshrl.u32 %v1435, 5
    %v1437 = vand.u32 %v1435, 31
    %v1438 = vsub.s32 32, %v1437
    %v1439 = vshrl.u32 683565275, %v1438
    %v1440 = vshll.u32 683565275, %v1437
    %v1441 = vshrl.u32 2475754826, %v1438
    %v1442 = vor.u32 %v1440, %v1441
    %v1443 = vshll.u32 2475754826, %v1437
    %v1444 = vshrl.u32 2131351028, %v1438
    %v1445 = vor.u32 %v1443, %v1444
    %v1446 = vshll.u32 2131351028, %v1437
    %v1447 = vshrl.u32 2102212464, %v1438
    %v1448 = vor.u32 %v1446, %v1447
    %v1449 = vshll.u32 2102212464, %v1437
    %v1450 = vshrl.u32 920167782, %v1438
    %v1451 = vor.u32 %v1449, %v1450
    %v1452 = vshll.u32 920167782, %v1437
    %v1453 = vshrl.u32 1326507024, %v1438
    %v1454 = vor.u32 %v1452, %v1453
    %vm1455 = vcmp.lt.s32.totalorder %v1436, 1
    %vm1456 = vcmp.lt.s32.totalorder %v1436, 2
    %vm1457 = vcmp.lt.s32.totalorder %v1436, 3
    %vm1458 = vcmp.lt.s32.totalorder %v1436, 4
    %v1459 = vsel %vm1455, %v1439, %v1442
    %v1460 = vsel %vm1458, %v1448, 2102212464
    %v1461 = vsel %vm1457, %v1445, %v1460
    %v1462 = vsel %vm1456, %v1459, %v1461
    %v1463 = vsel %vm1455, %v1442, %v1445
    %v1464 = vsel %vm1458, %v1451, 920167782
    %v1465 = vsel %vm1457, %v1448, %v1464
    %v1466 = vsel %vm1456, %v1463, %v1465
    %v1467 = vsel %vm1455, %v1445, %v1448
    %v1468 = vsel %vm1458, %v1454, 1326507024
    %v1469 = vsel %vm1457, %v1451, %v1468
    %v1470 = vsel %vm1456, %v1467, %v1469
    %v1471 = vshll.u32 %v1431, 8
    %v1472 = vmul.u32.u64.compose %v1471, %v1470
    %v1473 = vextract.low.u32 %v1472
    %v1474 = vextract.high.u32 %v1472
    %v1475 = vmul.u32.u64.compose %v1471, %v1466
    %v1476 = vextract.low.u32 %v1475
    %v1477 = vextract.high.u32 %v1475
    %v1478 = vmul.u32 %v1471, %v1462
    %v1479 = vadd.s32 %v1474, %v1476
    %vm1480 = vc.u32 %v1474, %v1476
    %v1481 = vadd.s32 %v1477, 1
    %v1482 = vsel %vm1480, %v1481, %v1477
    %v1483 = vadd.s32 %v1478, %v1482
    %v1484 = vadd.s32 %v1483, 536870912
    %v1485 = vshrl.u32 %v1484, 30
    %v1486 = vshll.u32 %v1485, 30
    %v1487 = vsub.s32 %v1483, %v1486
    %vm1488 = vcmp.lt.s32.totalorder %v1487, 0
    %v1489 = vsub.s32 0, %v1487
    %v1490 = vsel %vm1488, %v1489, %v1487
    %v1491 = vclz %v1490
    %v1492 = vsub.s32 %v1491, 2
    %vm1493 = vcmp.gt.s32.totalorder 0, %v1492
    %v1494 = vsel %vm1493, 0, %v1492
    %v1495 = vsub.s32 32, %v1494
    %v1496 = vshll.u32 %v1487, %v1494
    %v1497 = vshrl.u32 %v1479, %v1495
    %v1498 = vor.u32 %v1496, %v1497
    %v1499 = vsub.s32 4294967266, %v1494
    %v1500 = vadd.s32 %v1499, 127
    %v1501 = vshll.u32 %v1500, 23
    %v1502 = vor.u32 4788187, %v1501
    %v1503 = vand.u32 2147483647, %v1502
    %v1505 = vcvt.s32.f32 %v1498
    %v1506 = vmul.f32 %v1505, %v1503
    %v1507 = vxor.u32 %v1506, 2147483648
    %v1508 = vsel %vm1425, %v1507, %v1506
    %v1509 = vsub.s32 4, %v1485
    %v1510 = vsel %vm1425, %v1509, %v1485
    %v1511 = vsel %vm1424, %v1318, %v1508
    %v1512 = vsel %vm1424, 0, %v1510
    %v1513 = vcosq.f32.pop %v1511
    %v1514 = vsinq.f32.pop %v1511
    %vm1515 = vweird.f32 %v1318
    %v1516 = vadd.s32 %v1512, 3
    %v1517 = vand.u32 %v1516, 3
    %vm1518 = vcmp.lt.s32.totalorder %v1517, 2
    %vm1519 = vcmp.eq.s32.totalorder %v1517, 0
    %v1520 = vxor.u32 %v1514, 2147483648
    %v1521 = vsel %vm1519, %v1513, %v1520
    %vm1522 = vcmp.eq.s32.totalorder %v1517, 2
    %v1523 = vxor.u32 %v1513, 2147483648
    %v1524 = vsel %vm1522, %v1523, %v1514
    %v1525 = vsel %vm1518, %v1521, %v1524
    %v1526 = vsel %vm1515, nan, %v1525
    %1529 = vrot.lane.b32.xlu0 %v1422, 9
    %v1530 = vpop.permute.xlu0 %1529
    %1531 = vrot.lane.b32.xlu0 %v1526, 9
    %v1532 = vpop.permute.xlu0 %1531
    %vm1535 = vcmask 97352
    %1536 = vst.msk [vmem:[#allocation2] sm:$0xff] %vm1535, %v1530
    %1537 = vst.msk [vmem:[#allocation2 + $0x8] sm:$0xff] %vm1535, %v1532
    %v1538 = vand.u32 2147483647, %v1317
    %vm1539 = vcmp.le.f32.partialorder %v1538, 0.7853982
    %vm1540 = vcmp.lt.s32.totalorder %v1317, 0
    %v1541 = vand.u32 %v1317, 2139095040
    %v1542 = vshrl.u32 %v1541, 23
    %v1543 = vsub.s32 %v1542, 127
    %v1544 = vand.u32 2147483647, %v1317
    %v1545 = vand.u32 %v1544, 8388607
    %v1546 = vor.u32 %v1545, 8388608
    %v1547 = vsub.s32 0, %v1546
    %v1548 = vadd.s32 %v1543, 1
    %vm1549 = vcmp.gt.s32.totalorder %v1548, 0
    %v1550 = vsel %vm1549, %v1548, 0
    %v1551 = vshrl.u32 %v1550, 5
    %v1552 = vand.u32 %v1550, 31
    %v1553 = vsub.s32 32, %v1552
    %v1554 = vshrl.u32 683565275, %v1553
    %v1555 = vshll.u32 683565275, %v1552
    %v1556 = vshrl.u32 2475754826, %v1553
    %v1557 = vor.u32 %v1555, %v1556
    %v1558 = vshll.u32 2475754826, %v1552
    %v1559 = vshrl.u32 2131351028, %v1553
    %v1560 = vor.u32 %v1558, %v1559
    %v1561 = vshll.u32 2131351028, %v1552
    %v1562 = vshrl.u32 2102212464, %v1553
    %v1563 = vor.u32 %v1561, %v1562
    %v1564 = vshll.u32 2102212464, %v1552
    %v1565 = vshrl.u32 920167782, %v1553
    %v1566 = vor.u32 %v1564, %v1565
    %v1567 = vshll.u32 920167782, %v1552
    %v1568 = vshrl.u32 1326507024, %v1553
    %v1569 = vor.u32 %v1567, %v1568
    %vm1570 = vcmp.lt.s32.totalorder %v1551, 1
    %vm1571 = vcmp.lt.s32.totalorder %v1551, 2
    %vm1572 = vcmp.lt.s32.totalorder %v1551, 3
    %vm1573 = vcmp.lt.s32.totalorder %v1551, 4
    %v1574 = vsel %vm1570, %v1554, %v1557
    %v1575 = vsel %vm1573, %v1563, 2102212464
    %v1576 = vsel %vm1572, %v1560, %v1575
    %v1577 = vsel %vm1571, %v1574, %v1576
    %v1578 = vsel %vm1570, %v1557, %v1560
    %v1579 = vsel %vm1573, %v1566, 920167782
    %v1580 = vsel %vm1572, %v1563, %v1579
    %v1581 = vsel %vm1571, %v1578, %v1580
    %v1582 = vsel %vm1570, %v1560, %v1563
    %v1583 = vsel %vm1573, %v1569, 1326507024
    %v1584 = vsel %vm1572, %v1566, %v1583
    %v1585 = vsel %vm1571, %v1582, %v1584
    %v1586 = vshll.u32 %v1546, 8
    %v1587 = vmul.u32.u64.compose %v1586, %v1585
    %v1588 = vextract.low.u32 %v1587
    %v1589 = vextract.high.u32 %v1587
    %v1590 = vmul.u32.u64.compose %v1586, %v1581
    %v1591 = vextract.low.u32 %v1590
    %v1592 = vextract.high.u32 %v1590
    %v1593 = vmul.u32 %v1586, %v1577
    %v1594 = vadd.s32 %v1589, %v1591
    %vm1595 = vc.u32 %v1589, %v1591
    %v1596 = vadd.s32 %v1592, 1
    %v1597 = vsel %vm1595, %v1596, %v1592
    %v1598 = vadd.s32 %v1593, %v1597
    %v1599 = vadd.s32 %v1598, 536870912
    %v1600 = vshrl.u32 %v1599, 30
    %v1601 = vshll.u32 %v1600, 30
    %v1602 = vsub.s32 %v1598, %v1601
    %vm1603 = vcmp.lt.s32.totalorder %v1602, 0
    %v1604 = vsub.s32 0, %v1602
    %v1605 = vsel %vm1603, %v1604, %v1602
    %v1606 = vclz %v1605
    %v1607 = vsub.s32 %v1606, 2
    %vm1608 = vcmp.gt.s32.totalorder 0, %v1607
    %v1609 = vsel %vm1608, 0, %v1607
    %v1610 = vsub.s32 32, %v1609
    %v1611 = vshll.u32 %v1602, %v1609
    %v1612 = vshrl.u32 %v1594, %v1610
    %v1613 = vor.u32 %v1611, %v1612
    %v1614 = vsub.s32 4294967266, %v1609
    %v1615 = vadd.s32 %v1614, 127
    %v1616 = vshll.u32 %v1615, 23
    %v1617 = vor.u32 4788187, %v1616
    %v1618 = vand.u32 2147483647, %v1617
    %v1620 = vcvt.s32.f32 %v1613
    %v1621 = vmul.f32 %v1620, %v1618
    %v1622 = vxor.u32 %v1621, 2147483648
    %v1623 = vsel %vm1540, %v1622, %v1621
    %v1624 = vsub.s32 4, %v1600
    %v1625 = vsel %vm1540, %v1624, %v1600
    %v1626 = vsel %vm1539, %v1317, %v1623
    %v1627 = vsel %vm1539, 0, %v1625
    %v1628 = vcosq.f32.pop %v1626
    %v1629 = vsinq.f32.pop %v1626
    %vm1630 = vweird.f32 %v1317
    %v1631 = vand.u32 %v1627, 3
    %vm1632 = vcmp.lt.s32.totalorder %v1631, 2
    %vm1633 = vcmp.eq.s32.totalorder %v1631, 0
    %v1634 = vxor.u32 %v1629, 2147483648
    %v1635 = vsel %vm1633, %v1628, %v1634
    %vm1636 = vcmp.eq.s32.totalorder %v1631, 2
    %v1637 = vxor.u32 %v1628, 2147483648
    %v1638 = vsel %vm1636, %v1637, %v1629
    %v1639 = vsel %vm1632, %v1635, %v1638
    %v1640 = vsel %vm1630, nan, %v1639
    %v1641 = vand.u32 2147483647, %v1318
    %vm1642 = vcmp.le.f32.partialorder %v1641, 0.7853982
    %vm1643 = vcmp.lt.s32.totalorder %v1318, 0
    %v1644 = vand.u32 %v1318, 2139095040
    %v1645 = vshrl.u32 %v1644, 23
    %v1646 = vsub.s32 %v1645, 127
    %v1647 = vand.u32 2147483647, %v1318
    %v1648 = vand.u32 %v1647, 8388607
    %v1649 = vor.u32 %v1648, 8388608
    %v1650 = vsub.s32 0, %v1649
    %v1651 = vadd.s32 %v1646, 1
    %vm1652 = vcmp.gt.s32.totalorder %v1651, 0
    %v1653 = vsel %vm1652, %v1651, 0
    %v1654 = vshrl.u32 %v1653, 5
    %v1655 = vand.u32 %v1653, 31
    %v1656 = vsub.s32 32, %v1655
    %v1657 = vshrl.u32 683565275, %v1656
    %v1658 = vshll.u32 683565275, %v1655
    %v1659 = vshrl.u32 2475754826, %v1656
    %v1660 = vor.u32 %v1658, %v1659
    %v1661 = vshll.u32 2475754826, %v1655
    %v1662 = vshrl.u32 2131351028, %v1656
    %v1663 = vor.u32 %v1661, %v1662
    %v1664 = vshll.u32 2131351028, %v1655
    %v1665 = vshrl.u32 2102212464, %v1656
    %v1666 = vor.u32 %v1664, %v1665
    %v1667 = vshll.u32 2102212464, %v1655
    %v1668 = vshrl.u32 920167782, %v1656
    %v1669 = vor.u32 %v1667, %v1668
    %v1670 = vshll.u32 920167782, %v1655
    %v1671 = vshrl.u32 1326507024, %v1656
    %v1672 = vor.u32 %v1670, %v1671
    %vm1673 = vcmp.lt.s32.totalorder %v1654, 1
    %vm1674 = vcmp.lt.s32.totalorder %v1654, 2
    %vm1675 = vcmp.lt.s32.totalorder %v1654, 3
    %vm1676 = vcmp.lt.s32.totalorder %v1654, 4
    %v1677 = vsel %vm1673, %v1657, %v1660
    %v1678 = vsel %vm1676, %v1666, 2102212464
    %v1679 = vsel %vm1675, %v1663, %v1678
    %v1680 = vsel %vm1674, %v1677, %v1679
    %v1681 = vsel %vm1673, %v1660, %v1663
    %v1682 = vsel %vm1676, %v1669, 920167782
    %v1683 = vsel %vm1675, %v1666, %v1682
    %v1684 = vsel %vm1674, %v1681, %v1683
    %v1685 = vsel %vm1673, %v1663, %v1666
    %v1686 = vsel %vm1676, %v1672, 1326507024
    %v1687 = vsel %vm1675, %v1669, %v1686
    %v1688 = vsel %vm1674, %v1685, %v1687
    %v1689 = vshll.u32 %v1649, 8
    %v1690 = vmul.u32.u64.compose %v1689, %v1688
    %v1691 = vextract.low.u32 %v1690
    %v1692 = vextract.high.u32 %v1690
    %v1693 = vmul.u32.u64.compose %v1689, %v1684
    %v1694 = vextract.low.u32 %v1693
    %v1695 = vextract.high.u32 %v1693
    %v1696 = vmul.u32 %v1689, %v1680
    %v1697 = vadd.s32 %v1692, %v1694
    %vm1698 = vc.u32 %v1692, %v1694
    %v1699 = vadd.s32 %v1695, 1
    %v1700 = vsel %vm1698, %v1699, %v1695
    %v1701 = vadd.s32 %v1696, %v1700
    %v1702 = vadd.s32 %v1701, 536870912
    %v1703 = vshrl.u32 %v1702, 30
    %v1704 = vshll.u32 %v1703, 30
    %v1705 = vsub.s32 %v1701, %v1704
    %vm1706 = vcmp.lt.s32.totalorder %v1705, 0
    %v1707 = vsub.s32 0, %v1705
    %v1708 = vsel %vm1706, %v1707, %v1705
    %v1709 = vclz %v1708
    %v1710 = vsub.s32 %v1709, 2
    %vm1711 = vcmp.gt.s32.totalorder 0, %v1710
    %v1712 = vsel %vm1711, 0, %v1710
    %v1713 = vsub.s32 32, %v1712
    %v1714 = vshll.u32 %v1705, %v1712
    %v1715 = vshrl.u32 %v1697, %v1713
    %v1716 = vor.u32 %v1714, %v1715
    %v1717 = vsub.s32 4294967266, %v1712
    %v1718 = vadd.s32 %v1717, 127
    %v1719 = vshll.u32 %v1718, 23
    %v1720 = vor.u32 4788187, %v1719
    %v1721 = vand.u32 2147483647, %v1720
    %v1723 = vcvt.s32.f32 %v1716
    %v1724 = vmul.f32 %v1723, %v1721
    %v1725 = vxor.u32 %v1724, 2147483648
    %v1726 = vsel %vm1643, %v1725, %v1724
    %v1727 = vsub.s32 4, %v1703
    %v1728 = vsel %vm1643, %v1727, %v1703
    %v1729 = vsel %vm1642, %v1318, %v1726
    %v1730 = vsel %vm1642, 0, %v1728
    %v1731 = vcosq.f32.pop %v1729
    %v1732 = vsinq.f32.pop %v1729
    %vm1733 = vweird.f32 %v1318
    %v1734 = vand.u32 %v1730, 3
    %vm1735 = vcmp.lt.s32.totalorder %v1734, 2
    %vm1736 = vcmp.eq.s32.totalorder %v1734, 0
    %v1737 = vxor.u32 %v1732, 2147483648
    %v1738 = vsel %vm1736, %v1731, %v1737
    %vm1739 = vcmp.eq.s32.totalorder %v1734, 2
    %v1740 = vxor.u32 %v1731, 2147483648
    %v1741 = vsel %vm1739, %v1740, %v1732
    %v1742 = vsel %vm1735, %v1738, %v1741
    %v1743 = vsel %vm1733, nan, %v1742
    %1746 = vrot.lane.b32.xlu0 %v1640, 21
    %v1747 = vpop.permute.xlu0 %1746
    %1748 = vrot.lane.b32.xlu0 %v1743, 21
    %v1749 = vpop.permute.xlu0 %1748
    %vm1752 = vcmask 195752
    %1753 = vst.msk [vmem:[#allocation2] sm:$0xff] %vm1752, %v1747
    %1754 = vst.msk [vmem:[#allocation2 + $0x8] sm:$0xff] %vm1752, %v1749
    // Predicated region
    $region6: #{tpu_custom_call.1} parent=1 // pred_check
      _
    $region7: #{tpu_custom_call.1} parent=1 // pred_check_branch
      %1756 = sbr.rel (0) target = $region9
    $region8: #{tpu_custom_call.1} parent=1 // pred_region
      %s1758 = ssub.s32 256, 256
      %1759 = vsyncadd [#allocation3], %s1758
      %s1760 = sshll.u32 [#allocation2], 4
      %s1761 = int_to_ptr.vmem [resolvable:$true] %s1760
      %1766 = dma.vmem_to_hbm [thread:$0]  %s1761, 256, %s1, [#allocation3], 128, 128, 8
    $region9: #{tpu_custom_call.1} parent=1 // pred_fallthru
      _
    // Predicated region
    $region10: #{tpu_custom_call.1} parent=1 // pred_check
      _
    $region11: #{tpu_custom_call.1} parent=1 // pred_check_branch
      %1768 = sbr.rel (0) target = $region13
    $region12: #{tpu_custom_call.1} parent=1 // pred_region
      %1769 = dma.done [#allocation3], 256
    $region13: #{tpu_custom_call.1} parent=1 // pred_fallthru
      _
    %1770 = vsyncpa [#allocation3], 1

</llo_original>
